<compile_context>
chip_gen: v5e
topology: v5e:2x2
jax: 0.10.0
libtpu: 0.0.40
codegen_flags: <defaults>
</compile_context>

<pallas_src>
import jax
import jax.numpy as jnp
from jax.experimental import pallas as pl
from jax.experimental.pallas import tpu as pltpu

S = 4          # number of scales
REDUCTION = 4  # SE reduction factor


def psa_kernel(x_ref, wc_ref, b_ref, w1_ref, w2_ref, out_ref):
    # x_ref  : (bt, C, Hp)      zero-padded input tile, Hp = H + 2*pmax
    # wc_ref : (S*Kmax, Cs, Cs) conv tap weights; row s*Kmax + d holds the tap
    #                           whose padded input window starts at offset d
    # b_ref  : (S, Cs, 1)       conv biases
    # w1_ref : (S, Cs, Cr)      SE squeeze weight (contraction axis leading)
    # w2_ref : (S, Cs, Cr)      SE excite weight (output axis leading)
    # out_ref: (bt, C, H)
    bt, C, Hp = x_ref.shape
    H = out_ref.shape[2]
    S_, Cs, Cr = w1_ref.shape
    del Cr
    Kmax = wc_ref.shape[0] // S_
    pmax = (Kmax - 1) // 2

    # Hoist every (tiny) weight load out of the batch loop.
    taps, biases, w1l, w2l = [], [], [], []
    for s in range(S_):
        K = 2 * (s + 1) + 1
        off = pmax - (s + 1)
        taps.append([(off + j, wc_ref[s * Kmax + off + j]) for j in range(K)])
        biases.append(b_ref[s])      # (Cs, 1)
        w1l.append(w1_ref[s])        # (Cs, Cr)
        w2l.append(w2_ref[s])        # (Cs, Cr)

    for b in range(bt):              # static unroll; bt kept small by the wrapper
        xb = x_ref[b]                # (C, Hp)
        convs, exps = [], []
        for s in range(S_):
            xs = xb[s * Cs:(s + 1) * Cs, :]                      # (Cs, Hp)
            acc = None
            for d, w in taps[s]:                                  # exact taps only
                part = jnp.dot(w, xs[:, d:d + H],
                               preferred_element_type=jnp.float32)   # MXU, f32 acc
                acc = part if acc is None else acc + part
            conv_s = acc + biases[s]                              # (Cs, H) bias on VPU
            convs.append(conv_s)
            # SE: AdaptiveAvgPool1d(1) -> 1x1 conv -> ReLU -> 1x1 conv -> sigmoid
            m_s = jnp.mean(conv_s, axis=1, keepdims=True)         # (Cs, 1)
            z = jnp.maximum(jnp.sum(w1l[s] * m_s, axis=0, keepdims=True), 0.0)  # (1, Cr)
            se = jnp.sum(w2l[s] * z, axis=1, keepdims=True)       # (Cs, 1)
            exps.append(jnp.exp(jax.nn.sigmoid(se)))              # (Cs, 1)

        # Softmax over the scale axis (sigmoid outputs are bounded -> no max shift).
        denom = exps[0]
        for s in range(1, S_):
            denom = denom + exps[s]
        inv = 1.0 / denom                                         # exact (tolerance)

        # Fused weight multiply immediately before a single store per batch row.
        out_ref[b] = jnp.concatenate(
            [convs[s] * (exps[s] * inv) for s in range(S_)], axis=0)


def _pick_batch_tile(B, C, H, Hp, itemsize,
                     vmem_budget=40 * 1024 * 1024, max_unroll=8):
    """Largest divisor of B whose per-step working set fits the VMEM budget,
    keeping >= 2 grid steps whenever B >= 2 (v7x megacore) and a small
    in-kernel batch unroll."""
    def step_bytes(bt):
        xin = bt * C * Hp * itemsize           # input block
        out = bt * C * H * 4                   # f32 output block
        return 2 * (xin + out) + out           # double buffers + live conv temps
    best = 1
    for bt in range(1, min(B, max_unroll) + 1):
        if B % bt:
            continue
        if B >= 2 and B // bt < 2:
            continue                           # keep both v7x TensorCores busy
        if step_bytes(bt) <= vmem_budget:
            best = bt
    return best


def psa_forward(x, conv_ws, conv_bs, w1s, w2s, compute_dtype=jnp.float32):
    """x: (B, C, H) float32. Returns (B, C, H) float32.

    compute_dtype=jnp.bfloat16 halves the conv-matmul input DMA/VMEM on
    v6e/v7x (accumulation stays f32); default f32 preserves rtol=1e-4/atol=1e-5.
    """
    B, C, H = x.shape
    Cs = C // S
    Cr = w1s[0].shape[0]
    Kmax = 2 * S + 1
    pmax = S
    Hp = H + 2 * pmax

    # Zero-pad once (cheap: +2*pmax columns); no im2col intermediate in HBM.
    xpad = jnp.pad(x, ((0, 0), (0, 0), (pmax, pmax))).astype(compute_dtype)   # (B, C, Hp)

    # Conv tap weights stacked by (scale, absolute padded offset d); the kernel
    # only ever reads the valid taps, so no guaranteed-zero MACs.
    Wstack = jnp.zeros((S * Kmax, Cs, Cs), jnp.float32)
    for s in range(S):
        K = 2 * (s + 1) + 1
        off = pmax - (s + 1)
        for j in range(K):
            Wstack = Wstack.at[s * Kmax + off + j].set(conv_ws[s][:, :, j])
    Wstack = Wstack.astype(compute_dtype)

    bias3 = jnp.stack(conv_bs)[:, :, None].astype(jnp.float32)   # (S, Cs, 1)
    w1t = jnp.stack([w.T for w in w1s]).astype(jnp.float32)      # (S, Cs, Cr)
    w2m = jnp.stack(w2s).astype(jnp.float32)                     # (S, Cs, Cr)

    itemsize = jnp.dtype(compute_dtype).itemsize
    bt = _pick_batch_tile(B, C, H, Hp, itemsize)
    nb = B // bt

    weight_bytes = Wstack.size * itemsize + (bias3.size + w1t.size + w2m.size) * 4
    step_bytes = (2 * (bt * C * Hp * itemsize + bt * C * H * 4)
                  + bt * C * H * 4 + weight_bytes)
    vmem_limit = int(min(max(step_bytes + (4 << 20), 32 << 20), 64 << 20))

    conv_flops = 2 * B * H * sum((2 * (s + 1) + 1) * Cs * Cs for s in range(S))
    se_flops = 4 * B * S * Cs * Cr
    cost = pl.CostEstimate(
        flops=conv_flops + se_flops,
        transcendentals=2 * B * C,
        bytes_accessed=B * C * Hp * itemsize + B * C * H * 4 + weight_bytes)

    out = pl.pallas_call(
        psa_kernel,
        out_shape=jax.ShapeDtypeStruct((B, C, H), jnp.float32),
        grid=(nb,),
        in_specs=[
            pl.BlockSpec((bt, C, Hp), lambda i: (i, 0, 0)),
            pl.BlockSpec((S * Kmax, Cs, Cs), lambda i: (0, 0, 0)),
            pl.BlockSpec((S, Cs, 1), lambda i: (0, 0, 0)),
            pl.BlockSpec((S, Cs, Cr), lambda i: (0, 0, 0)),
            pl.BlockSpec((S, Cs, Cr), lambda i: (0, 0, 0)),
        ],
        out_specs=pl.BlockSpec((bt, C, H), lambda i: (i, 0, 0)),
        compiler_params=pltpu.CompilerParams(
            dimension_semantics=("parallel",),
            vmem_limit_bytes=vmem_limit),
        cost_estimate=cost,
    )(xpad, Wstack, bias3, w1t, w2m)
    return out


def psa_reference(x, conv_ws, conv_bs, w1s, w2s):
    """Pure-JAX reference matching the PyTorch forward."""
    B, C, H = x.shape
    Cs = C // S
    xs = x.reshape(B, S, Cs, H)
    convs, ses = [], []
    for s in range(S):
        K = 2 * (s + 1) + 1
        p = s + 1
        xp = jnp.pad(xs[:, s], ((0, 0), (0, 0), (p, p)))
        out = jnp.zeros((B, Cs, H), jnp.float32)
        for j in range(K):
            out = out + jnp.einsum('oc,bct->bot', conv_ws[s][:, :, j], xp[:, :, j:j + H])
        out = out + conv_bs[s][None, :, None]
        convs.append(out)
    for s in range(S):
        m = convs[s].mean(axis=-1)                          # (B, Cs)
        z = jax.nn.relu(m @ w1s[s].T)                       # (B, Cr)
        se = jax.nn.sigmoid(z @ w2s[s].T)                   # (B, Cs)
        ses.append(se)
    SE = jnp.stack(ses, axis=1)                             # (B, S, Cs)
    w = jax.nn.softmax(SE, axis=1)[..., None]               # broadcast over H
    out = jnp.stack(convs, axis=1) * w
    return out.reshape(B, C, H)


if __name__ == "__main__":
    B, C, H = 2, 16, 16          # channel=16, reduction=4, S=4 -> Cs=4, Cr=1
    Cs = C // S
    Cr = C // (S * REDUCTION)

    key = jax.random.PRNGKey(0)
    keys = jax.random.split(key, 1 + 4 * S)
    x = jax.random.normal(keys[0], (B, C, H), jnp.float32)

    conv_ws, conv_bs, w1s, w2s = [], [], [], []
    for s in range(S):
        K = 2 * (s + 1) + 1
        k0, k1, k2, k3 = keys[1 + 4 * s:1 + 4 * (s + 1)]
        conv_ws.append(0.1 * jax.random.normal(k0, (Cs, Cs, K), jnp.float32))
        conv_bs.append(0.1 * jax.random.normal(k1, (Cs,), jnp.float32))
        w1s.append(0.1 * jax.random.normal(k2, (Cr, Cs), jnp.float32))
        w2s.append(0.1 * jax.random.normal(k3, (Cs, Cr), jnp.float32))

    out = psa_forward(x, conv_ws, conv_bs, w1s, w2s)
    jax.block_until_ready(out)

    ref = psa_reference(x, conv_ws, conv_bs, w1s, w2s)
    assert out.shape == (B, C, H)
    err = jnp.max(jnp.abs(out - ref))
    assert jnp.allclose(out, ref, rtol=1e-4, atol=1e-5), f"max err {err}"

    print("KERNEL_OK")
</pallas_src>

<mosaic_0001>
module attributes {stable_mosaic.version = 11 : i64} {
  func.func @psa_kernel(%arg0: i32, %arg1: memref<1x16x24xf32, #tpu.memory_space<vmem>>, %arg2: memref<36x4x4xf32, #tpu.memory_space<vmem>>, %arg3: memref<4x4x1xf32, #tpu.memory_space<vmem>>, %arg4: memref<4x4x1xf32, #tpu.memory_space<vmem>>, %arg5: memref<4x4x1xf32, #tpu.memory_space<vmem>>, %arg6: memref<1x16x16xf32, #tpu.memory_space<vmem>>) attributes {dimension_semantics = [#tpu.dimension_semantics<parallel>], iteration_bounds = array<i64: 2>, scalar_prefetch = 0 : i64, scratch_operands = 0 : i64, tpu.core_type = #tpu.core_type<tc>, window_params = [{transform_indices = @transform_0, window_bounds = array<i64: 1, 16, 24>}, {pipeline_mode = #tpu.pipeline_mode<synchronous>, transform_indices = @transform_1, window_bounds = array<i64: 36, 4, 4>}, {pipeline_mode = #tpu.pipeline_mode<synchronous>, transform_indices = @transform_2, window_bounds = array<i64: 4, 4, 1>}, {pipeline_mode = #tpu.pipeline_mode<synchronous>, transform_indices = @transform_3, window_bounds = array<i64: 4, 4, 1>}, {pipeline_mode = #tpu.pipeline_mode<synchronous>, transform_indices = @transform_4, window_bounds = array<i64: 4, 4, 1>}, {transform_indices = @transform_5, window_bounds = array<i64: 1, 16, 16>}]} {
    %c3 = arith.constant 3 : index
    %c0 = arith.constant 0 : index
    %c0_0 = arith.constant 0 : index
    %0 = vector.load %arg2[%c3, %c0, %c0_0] : memref<36x4x4xf32, #tpu.memory_space<vmem>>, vector<1x4x4xf32>
    %1 = vector.shape_cast %0 : vector<1x4x4xf32> to vector<4x4xf32>
    %c4 = arith.constant 4 : index
    %c0_1 = arith.constant 0 : index
    %c0_2 = arith.constant 0 : index
    %2 = vector.load %arg2[%c4, %c0_1, %c0_2] : memref<36x4x4xf32, #tpu.memory_space<vmem>>, vector<1x4x4xf32>
    %3 = vector.shape_cast %2 : vector<1x4x4xf32> to vector<4x4xf32>
    %c5 = arith.constant 5 : index
    %c0_3 = arith.constant 0 : index
    %c0_4 = arith.constant 0 : index
    %4 = vector.load %arg2[%c5, %c0_3, %c0_4] : memref<36x4x4xf32, #tpu.memory_space<vmem>>, vector<1x4x4xf32>
    %5 = vector.shape_cast %4 : vector<1x4x4xf32> to vector<4x4xf32>
    %c0_5 = arith.constant 0 : index
    %c0_6 = arith.constant 0 : index
    %c0_7 = arith.constant 0 : index
    %6 = vector.load %arg3[%c0_5, %c0_6, %c0_7] : memref<4x4x1xf32, #tpu.memory_space<vmem>>, vector<1x4x1xf32>
    %7 = vector.shape_cast %6 : vector<1x4x1xf32> to vector<4x1xf32>
    %c0_8 = arith.constant 0 : index
    %c0_9 = arith.constant 0 : index
    %c0_10 = arith.constant 0 : index
    %8 = vector.load %arg4[%c0_8, %c0_9, %c0_10] : memref<4x4x1xf32, #tpu.memory_space<vmem>>, vector<1x4x1xf32>
    %9 = vector.shape_cast %8 : vector<1x4x1xf32> to vector<4x1xf32>
    %c0_11 = arith.constant 0 : index
    %c0_12 = arith.constant 0 : index
    %c0_13 = arith.constant 0 : index
    %10 = vector.load %arg5[%c0_11, %c0_12, %c0_13] : memref<4x4x1xf32, #tpu.memory_space<vmem>>, vector<1x4x1xf32>
    %11 = vector.shape_cast %10 : vector<1x4x1xf32> to vector<4x1xf32>
    %c11 = arith.constant 11 : index
    %c0_14 = arith.constant 0 : index
    %c0_15 = arith.constant 0 : index
    %12 = vector.load %arg2[%c11, %c0_14, %c0_15] : memref<36x4x4xf32, #tpu.memory_space<vmem>>, vector<1x4x4xf32>
    %13 = vector.shape_cast %12 : vector<1x4x4xf32> to vector<4x4xf32>
    %c12 = arith.constant 12 : index
    %c0_16 = arith.constant 0 : index
    %c0_17 = arith.constant 0 : index
    %14 = vector.load %arg2[%c12, %c0_16, %c0_17] : memref<36x4x4xf32, #tpu.memory_space<vmem>>, vector<1x4x4xf32>
    %15 = vector.shape_cast %14 : vector<1x4x4xf32> to vector<4x4xf32>
    %c13 = arith.constant 13 : index
    %c0_18 = arith.constant 0 : index
    %c0_19 = arith.constant 0 : index
    %16 = vector.load %arg2[%c13, %c0_18, %c0_19] : memref<36x4x4xf32, #tpu.memory_space<vmem>>, vector<1x4x4xf32>
    %17 = vector.shape_cast %16 : vector<1x4x4xf32> to vector<4x4xf32>
    %c14 = arith.constant 14 : index
    %c0_20 = arith.constant 0 : index
    %c0_21 = arith.constant 0 : index
    %18 = vector.load %arg2[%c14, %c0_20, %c0_21] : memref<36x4x4xf32, #tpu.memory_space<vmem>>, vector<1x4x4xf32>
    %19 = vector.shape_cast %18 : vector<1x4x4xf32> to vector<4x4xf32>
    %c15 = arith.constant 15 : index
    %c0_22 = arith.constant 0 : index
    %c0_23 = arith.constant 0 : index
    %20 = vector.load %arg2[%c15, %c0_22, %c0_23] : memref<36x4x4xf32, #tpu.memory_space<vmem>>, vector<1x4x4xf32>
    %21 = vector.shape_cast %20 : vector<1x4x4xf32> to vector<4x4xf32>
    %c1 = arith.constant 1 : index
    %c0_24 = arith.constant 0 : index
    %c0_25 = arith.constant 0 : index
    %22 = vector.load %arg3[%c1, %c0_24, %c0_25] : memref<4x4x1xf32, #tpu.memory_space<vmem>>, vector<1x4x1xf32>
    %23 = vector.shape_cast %22 : vector<1x4x1xf32> to vector<4x1xf32>
    %c1_26 = arith.constant 1 : index
    %c0_27 = arith.constant 0 : index
    %c0_28 = arith.constant 0 : index
    %24 = vector.load %arg4[%c1_26, %c0_27, %c0_28] : memref<4x4x1xf32, #tpu.memory_space<vmem>>, vector<1x4x1xf32>
    %25 = vector.shape_cast %24 : vector<1x4x1xf32> to vector<4x1xf32>
    %c1_29 = arith.constant 1 : index
    %c0_30 = arith.constant 0 : index
    %c0_31 = arith.constant 0 : index
    %26 = vector.load %arg5[%c1_29, %c0_30, %c0_31] : memref<4x4x1xf32, #tpu.memory_space<vmem>>, vector<1x4x1xf32>
    %27 = vector.shape_cast %26 : vector<1x4x1xf32> to vector<4x1xf32>
    %c19 = arith.constant 19 : index
    %c0_32 = arith.constant 0 : index
    %c0_33 = arith.constant 0 : index
    %28 = vector.load %arg2[%c19, %c0_32, %c0_33] : memref<36x4x4xf32, #tpu.memory_space<vmem>>, vector<1x4x4xf32>
    %29 = vector.shape_cast %28 : vector<1x4x4xf32> to vector<4x4xf32>
    %c20 = arith.constant 20 : index
    %c0_34 = arith.constant 0 : index
    %c0_35 = arith.constant 0 : index
    %30 = vector.load %arg2[%c20, %c0_34, %c0_35] : memref<36x4x4xf32, #tpu.memory_space<vmem>>, vector<1x4x4xf32>
    %31 = vector.shape_cast %30 : vector<1x4x4xf32> to vector<4x4xf32>
    %c21 = arith.constant 21 : index
    %c0_36 = arith.constant 0 : index
    %c0_37 = arith.constant 0 : index
    %32 = vector.load %arg2[%c21, %c0_36, %c0_37] : memref<36x4x4xf32, #tpu.memory_space<vmem>>, vector<1x4x4xf32>
    %33 = vector.shape_cast %32 : vector<1x4x4xf32> to vector<4x4xf32>
    %c22 = arith.constant 22 : index
    %c0_38 = arith.constant 0 : index
    %c0_39 = arith.constant 0 : index
    %34 = vector.load %arg2[%c22, %c0_38, %c0_39] : memref<36x4x4xf32, #tpu.memory_space<vmem>>, vector<1x4x4xf32>
    %35 = vector.shape_cast %34 : vector<1x4x4xf32> to vector<4x4xf32>
    %c23 = arith.constant 23 : index
    %c0_40 = arith.constant 0 : index
    %c0_41 = arith.constant 0 : index
    %36 = vector.load %arg2[%c23, %c0_40, %c0_41] : memref<36x4x4xf32, #tpu.memory_space<vmem>>, vector<1x4x4xf32>
    %37 = vector.shape_cast %36 : vector<1x4x4xf32> to vector<4x4xf32>
    %c24 = arith.constant 24 : index
    %c0_42 = arith.constant 0 : index
    %c0_43 = arith.constant 0 : index
    %38 = vector.load %arg2[%c24, %c0_42, %c0_43] : memref<36x4x4xf32, #tpu.memory_space<vmem>>, vector<1x4x4xf32>
    %39 = vector.shape_cast %38 : vector<1x4x4xf32> to vector<4x4xf32>
    %c25 = arith.constant 25 : index
    %c0_44 = arith.constant 0 : index
    %c0_45 = arith.constant 0 : index
    %40 = vector.load %arg2[%c25, %c0_44, %c0_45] : memref<36x4x4xf32, #tpu.memory_space<vmem>>, vector<1x4x4xf32>
    %41 = vector.shape_cast %40 : vector<1x4x4xf32> to vector<4x4xf32>
    %c2 = arith.constant 2 : index
    %c0_46 = arith.constant 0 : index
    %c0_47 = arith.constant 0 : index
    %42 = vector.load %arg3[%c2, %c0_46, %c0_47] : memref<4x4x1xf32, #tpu.memory_space<vmem>>, vector<1x4x1xf32>
    %43 = vector.shape_cast %42 : vector<1x4x1xf32> to vector<4x1xf32>
    %c2_48 = arith.constant 2 : index
    %c0_49 = arith.constant 0 : index
    %c0_50 = arith.constant 0 : index
    %44 = vector.load %arg4[%c2_48, %c0_49, %c0_50] : memref<4x4x1xf32, #tpu.memory_space<vmem>>, vector<1x4x1xf32>
    %45 = vector.shape_cast %44 : vector<1x4x1xf32> to vector<4x1xf32>
    %c2_51 = arith.constant 2 : index
    %c0_52 = arith.constant 0 : index
    %c0_53 = arith.constant 0 : index
    %46 = vector.load %arg5[%c2_51, %c0_52, %c0_53] : memref<4x4x1xf32, #tpu.memory_space<vmem>>, vector<1x4x1xf32>
    %47 = vector.shape_cast %46 : vector<1x4x1xf32> to vector<4x1xf32>
    %c27 = arith.constant 27 : index
    %c0_54 = arith.constant 0 : index
    %c0_55 = arith.constant 0 : index
    %48 = vector.load %arg2[%c27, %c0_54, %c0_55] : memref<36x4x4xf32, #tpu.memory_space<vmem>>, vector<1x4x4xf32>
    %49 = vector.shape_cast %48 : vector<1x4x4xf32> to vector<4x4xf32>
    %c28 = arith.constant 28 : index
    %c0_56 = arith.constant 0 : index
    %c0_57 = arith.constant 0 : index
    %50 = vector.load %arg2[%c28, %c0_56, %c0_57] : memref<36x4x4xf32, #tpu.memory_space<vmem>>, vector<1x4x4xf32>
    %51 = vector.shape_cast %50 : vector<1x4x4xf32> to vector<4x4xf32>
    %c29 = arith.constant 29 : index
    %c0_58 = arith.constant 0 : index
    %c0_59 = arith.constant 0 : index
    %52 = vector.load %arg2[%c29, %c0_58, %c0_59] : memref<36x4x4xf32, #tpu.memory_space<vmem>>, vector<1x4x4xf32>
    %53 = vector.shape_cast %52 : vector<1x4x4xf32> to vector<4x4xf32>
    %c30 = arith.constant 30 : index
    %c0_60 = arith.constant 0 : index
    %c0_61 = arith.constant 0 : index
    %54 = vector.load %arg2[%c30, %c0_60, %c0_61] : memref<36x4x4xf32, #tpu.memory_space<vmem>>, vector<1x4x4xf32>
    %55 = vector.shape_cast %54 : vector<1x4x4xf32> to vector<4x4xf32>
    %c31 = arith.constant 31 : index
    %c0_62 = arith.constant 0 : index
    %c0_63 = arith.constant 0 : index
    %56 = vector.load %arg2[%c31, %c0_62, %c0_63] : memref<36x4x4xf32, #tpu.memory_space<vmem>>, vector<1x4x4xf32>
    %57 = vector.shape_cast %56 : vector<1x4x4xf32> to vector<4x4xf32>
    %c32 = arith.constant 32 : index
    %c0_64 = arith.constant 0 : index
    %c0_65 = arith.constant 0 : index
    %58 = vector.load %arg2[%c32, %c0_64, %c0_65] : memref<36x4x4xf32, #tpu.memory_space<vmem>>, vector<1x4x4xf32>
    %59 = vector.shape_cast %58 : vector<1x4x4xf32> to vector<4x4xf32>
    %c33 = arith.constant 33 : index
    %c0_66 = arith.constant 0 : index
    %c0_67 = arith.constant 0 : index
    %60 = vector.load %arg2[%c33, %c0_66, %c0_67] : memref<36x4x4xf32, #tpu.memory_space<vmem>>, vector<1x4x4xf32>
    %61 = vector.shape_cast %60 : vector<1x4x4xf32> to vector<4x4xf32>
    %c34 = arith.constant 34 : index
    %c0_68 = arith.constant 0 : index
    %c0_69 = arith.constant 0 : index
    %62 = vector.load %arg2[%c34, %c0_68, %c0_69] : memref<36x4x4xf32, #tpu.memory_space<vmem>>, vector<1x4x4xf32>
    %63 = vector.shape_cast %62 : vector<1x4x4xf32> to vector<4x4xf32>
    %c35 = arith.constant 35 : index
    %c0_70 = arith.constant 0 : index
    %c0_71 = arith.constant 0 : index
    %64 = vector.load %arg2[%c35, %c0_70, %c0_71] : memref<36x4x4xf32, #tpu.memory_space<vmem>>, vector<1x4x4xf32>
    %65 = vector.shape_cast %64 : vector<1x4x4xf32> to vector<4x4xf32>
    %c3_72 = arith.constant 3 : index
    %c0_73 = arith.constant 0 : index
    %c0_74 = arith.constant 0 : index
    %66 = vector.load %arg3[%c3_72, %c0_73, %c0_74] : memref<4x4x1xf32, #tpu.memory_space<vmem>>, vector<1x4x1xf32>
    %67 = vector.shape_cast %66 : vector<1x4x1xf32> to vector<4x1xf32>
    %c3_75 = arith.constant 3 : index
    %c0_76 = arith.constant 0 : index
    %c0_77 = arith.constant 0 : index
    %68 = vector.load %arg4[%c3_75, %c0_76, %c0_77] : memref<4x4x1xf32, #tpu.memory_space<vmem>>, vector<1x4x1xf32>
    %69 = vector.shape_cast %68 : vector<1x4x1xf32> to vector<4x1xf32>
    %c3_78 = arith.constant 3 : index
    %c0_79 = arith.constant 0 : index
    %c0_80 = arith.constant 0 : index
    %70 = vector.load %arg5[%c3_78, %c0_79, %c0_80] : memref<4x4x1xf32, #tpu.memory_space<vmem>>, vector<1x4x1xf32>
    %71 = vector.shape_cast %70 : vector<1x4x1xf32> to vector<4x1xf32>
    %c0_81 = arith.constant 0 : index
    %c0_82 = arith.constant 0 : index
    %c0_83 = arith.constant 0 : index
    %72 = vector.load %arg1[%c0_81, %c0_82, %c0_83] : memref<1x16x24xf32, #tpu.memory_space<vmem>>, vector<1x16x24xf32>
    %73 = vector.shape_cast %72 : vector<1x16x24xf32> to vector<16x24xf32>
    %74 = vector.extract_strided_slice %73 {offsets = [0, 0], sizes = [4, 24], strides = [1, 1]} : vector<16x24xf32> to vector<4x24xf32>
    %75 = vector.extract_strided_slice %74 {offsets = [0, 3], sizes = [4, 16], strides = [1, 1]} : vector<4x24xf32> to vector<4x16xf32>
    %cst = arith.constant dense<0.000000e+00> : vector<4x16xf32>
    %76 = tpu.matmul %1, %75, %cst {dimension_numbers = #tpu.dot_dimension_numbers<[1], [0], [0], [1], [0, 0, 1, 1], [], []>} : vector<4x4xf32>, vector<4x16xf32>, vector<4x16xf32> -> vector<4x16xf32>
    %77 = vector.extract_strided_slice %74 {offsets = [0, 4], sizes = [4, 16], strides = [1, 1]} : vector<4x24xf32> to vector<4x16xf32>
    %cst_84 = arith.constant dense<0.000000e+00> : vector<4x16xf32>
    %78 = tpu.matmul %3, %77, %cst_84 {dimension_numbers = #tpu.dot_dimension_numbers<[1], [0], [0], [1], [0, 0, 1, 1], [], []>} : vector<4x4xf32>, vector<4x16xf32>, vector<4x16xf32> -> vector<4x16xf32>
    %79 = arith.addf %76, %78 : vector<4x16xf32>
    %80 = vector.extract_strided_slice %74 {offsets = [0, 5], sizes = [4, 16], strides = [1, 1]} : vector<4x24xf32> to vector<4x16xf32>
    %cst_85 = arith.constant dense<0.000000e+00> : vector<4x16xf32>
    %81 = tpu.matmul %5, %80, %cst_85 {dimension_numbers = #tpu.dot_dimension_numbers<[1], [0], [0], [1], [0, 0, 1, 1], [], []>} : vector<4x4xf32>, vector<4x16xf32>, vector<4x16xf32> -> vector<4x16xf32>
    %82 = arith.addf %79, %81 : vector<4x16xf32>
    %83 = vector.broadcast %7 : vector<4x1xf32> to vector<4x16xf32>
    %84 = arith.addf %82, %83 : vector<4x16xf32>
    %cst_86 = arith.constant dense<0.000000e+00> : vector<4xf32>
    %85 = vector.multi_reduction <add>, %84, %cst_86 [1] : vector<4x16xf32> to vector<4xf32>
    %86 = vector.shape_cast %85 : vector<4xf32> to vector<4x1xf32>
    %cst_87 = arith.constant 1.600000e+01 : f32
    %87 = vector.broadcast %cst_87 : f32 to vector<4x1xf32>
    %88 = arith.divf %86, %87 : vector<4x1xf32>
    %89 = arith.mulf %9, %88 : vector<4x1xf32>
    %cst_88 = arith.constant dense<0.000000e+00> : vector<1xf32>
    %90 = vector.multi_reduction <add>, %89, %cst_88 [0] : vector<4x1xf32> to vector<1xf32>
    %91 = vector.shape_cast %90 : vector<1xf32> to vector<1x1xf32>
    %cst_89 = arith.constant 0.000000e+00 : f32
    %92 = vector.broadcast %cst_89 : f32 to vector<1x1xf32>
    %93 = arith.maximumf %91, %92 : vector<1x1xf32>
    %94 = vector.broadcast %93 : vector<1x1xf32> to vector<4x1xf32>
    %95 = arith.mulf %11, %94 : vector<4x1xf32>
    %cst_90 = arith.constant dense<0.000000e+00> : vector<4xf32>
    %96 = vector.multi_reduction <add>, %95, %cst_90 [1] : vector<4x1xf32> to vector<4xf32>
    %97 = vector.shape_cast %96 : vector<4xf32> to vector<4x1xf32>
    %98 = arith.negf %97 : vector<4x1xf32>
    %99 = math.exp %98 : vector<4x1xf32>
    %cst_91 = arith.constant 1.000000e+00 : f32
    %100 = vector.broadcast %cst_91 : f32 to vector<4x1xf32>
    %101 = arith.addf %100, %99 : vector<4x1xf32>
    %102 = arith.divf %100, %101 : vector<4x1xf32>
    %103 = math.exp %102 : vector<4x1xf32>
    %104 = vector.extract_strided_slice %73 {offsets = [4, 0], sizes = [4, 24], strides = [1, 1]} : vector<16x24xf32> to vector<4x24xf32>
    %105 = vector.extract_strided_slice %104 {offsets = [0, 2], sizes = [4, 16], strides = [1, 1]} : vector<4x24xf32> to vector<4x16xf32>
    %cst_92 = arith.constant dense<0.000000e+00> : vector<4x16xf32>
    %106 = tpu.matmul %13, %105, %cst_92 {dimension_numbers = #tpu.dot_dimension_numbers<[1], [0], [0], [1], [0, 0, 1, 1], [], []>} : vector<4x4xf32>, vector<4x16xf32>, vector<4x16xf32> -> vector<4x16xf32>
    %107 = vector.extract_strided_slice %104 {offsets = [0, 3], sizes = [4, 16], strides = [1, 1]} : vector<4x24xf32> to vector<4x16xf32>
    %cst_93 = arith.constant dense<0.000000e+00> : vector<4x16xf32>
    %108 = tpu.matmul %15, %107, %cst_93 {dimension_numbers = #tpu.dot_dimension_numbers<[1], [0], [0], [1], [0, 0, 1, 1], [], []>} : vector<4x4xf32>, vector<4x16xf32>, vector<4x16xf32> -> vector<4x16xf32>
    %109 = arith.addf %106, %108 : vector<4x16xf32>
    %110 = vector.extract_strided_slice %104 {offsets = [0, 4], sizes = [4, 16], strides = [1, 1]} : vector<4x24xf32> to vector<4x16xf32>
    %cst_94 = arith.constant dense<0.000000e+00> : vector<4x16xf32>
    %111 = tpu.matmul %17, %110, %cst_94 {dimension_numbers = #tpu.dot_dimension_numbers<[1], [0], [0], [1], [0, 0, 1, 1], [], []>} : vector<4x4xf32>, vector<4x16xf32>, vector<4x16xf32> -> vector<4x16xf32>
    %112 = arith.addf %109, %111 : vector<4x16xf32>
    %113 = vector.extract_strided_slice %104 {offsets = [0, 5], sizes = [4, 16], strides = [1, 1]} : vector<4x24xf32> to vector<4x16xf32>
    %cst_95 = arith.constant dense<0.000000e+00> : vector<4x16xf32>
    %114 = tpu.matmul %19, %113, %cst_95 {dimension_numbers = #tpu.dot_dimension_numbers<[1], [0], [0], [1], [0, 0, 1, 1], [], []>} : vector<4x4xf32>, vector<4x16xf32>, vector<4x16xf32> -> vector<4x16xf32>
    %115 = arith.addf %112, %114 : vector<4x16xf32>
    %116 = vector.extract_strided_slice %104 {offsets = [0, 6], sizes = [4, 16], strides = [1, 1]} : vector<4x24xf32> to vector<4x16xf32>
    %cst_96 = arith.constant dense<0.000000e+00> : vector<4x16xf32>
    %117 = tpu.matmul %21, %116, %cst_96 {dimension_numbers = #tpu.dot_dimension_numbers<[1], [0], [0], [1], [0, 0, 1, 1], [], []>} : vector<4x4xf32>, vector<4x16xf32>, vector<4x16xf32> -> vector<4x16xf32>
    %118 = arith.addf %115, %117 : vector<4x16xf32>
    %119 = vector.broadcast %23 : vector<4x1xf32> to vector<4x16xf32>
    %120 = arith.addf %118, %119 : vector<4x16xf32>
    %cst_97 = arith.constant dense<0.000000e+00> : vector<4xf32>
    %121 = vector.multi_reduction <add>, %120, %cst_97 [1] : vector<4x16xf32> to vector<4xf32>
    %122 = vector.shape_cast %121 : vector<4xf32> to vector<4x1xf32>
    %cst_98 = arith.constant 1.600000e+01 : f32
    %123 = vector.broadcast %cst_98 : f32 to vector<4x1xf32>
    %124 = arith.divf %122, %123 : vector<4x1xf32>
    %125 = arith.mulf %25, %124 : vector<4x1xf32>
    %cst_99 = arith.constant dense<0.000000e+00> : vector<1xf32>
    %126 = vector.multi_reduction <add>, %125, %cst_99 [0] : vector<4x1xf32> to vector<1xf32>
    %127 = vector.shape_cast %126 : vector<1xf32> to vector<1x1xf32>
    %cst_100 = arith.constant 0.000000e+00 : f32
    %128 = vector.broadcast %cst_100 : f32 to vector<1x1xf32>
    %129 = arith.maximumf %127, %128 : vector<1x1xf32>
    %130 = vector.broadcast %129 : vector<1x1xf32> to vector<4x1xf32>
    %131 = arith.mulf %27, %130 : vector<4x1xf32>
    %cst_101 = arith.constant dense<0.000000e+00> : vector<4xf32>
    %132 = vector.multi_reduction <add>, %131, %cst_101 [1] : vector<4x1xf32> to vector<4xf32>
    %133 = vector.shape_cast %132 : vector<4xf32> to vector<4x1xf32>
    %134 = arith.negf %133 : vector<4x1xf32>
    %135 = math.exp %134 : vector<4x1xf32>
    %cst_102 = arith.constant 1.000000e+00 : f32
    %136 = vector.broadcast %cst_102 : f32 to vector<4x1xf32>
    %137 = arith.addf %136, %135 : vector<4x1xf32>
    %138 = arith.divf %136, %137 : vector<4x1xf32>
    %139 = math.exp %138 : vector<4x1xf32>
    %140 = vector.extract_strided_slice %73 {offsets = [8, 0], sizes = [4, 24], strides = [1, 1]} : vector<16x24xf32> to vector<4x24xf32>
    %141 = vector.extract_strided_slice %140 {offsets = [0, 1], sizes = [4, 16], strides = [1, 1]} : vector<4x24xf32> to vector<4x16xf32>
    %cst_103 = arith.constant dense<0.000000e+00> : vector<4x16xf32>
    %142 = tpu.matmul %29, %141, %cst_103 {dimension_numbers = #tpu.dot_dimension_numbers<[1], [0], [0], [1], [0, 0, 1, 1], [], []>} : vector<4x4xf32>, vector<4x16xf32>, vector<4x16xf32> -> vector<4x16xf32>
    %143 = vector.extract_strided_slice %140 {offsets = [0, 2], sizes = [4, 16], strides = [1, 1]} : vector<4x24xf32> to vector<4x16xf32>
    %cst_104 = arith.constant dense<0.000000e+00> : vector<4x16xf32>
    %144 = tpu.matmul %31, %143, %cst_104 {dimension_numbers = #tpu.dot_dimension_numbers<[1], [0], [0], [1], [0, 0, 1, 1], [], []>} : vector<4x4xf32>, vector<4x16xf32>, vector<4x16xf32> -> vector<4x16xf32>
    %145 = arith.addf %142, %144 : vector<4x16xf32>
    %146 = vector.extract_strided_slice %140 {offsets = [0, 3], sizes = [4, 16], strides = [1, 1]} : vector<4x24xf32> to vector<4x16xf32>
    %cst_105 = arith.constant dense<0.000000e+00> : vector<4x16xf32>
    %147 = tpu.matmul %33, %146, %cst_105 {dimension_numbers = #tpu.dot_dimension_numbers<[1], [0], [0], [1], [0, 0, 1, 1], [], []>} : vector<4x4xf32>, vector<4x16xf32>, vector<4x16xf32> -> vector<4x16xf32>
    %148 = arith.addf %145, %147 : vector<4x16xf32>
    %149 = vector.extract_strided_slice %140 {offsets = [0, 4], sizes = [4, 16], strides = [1, 1]} : vector<4x24xf32> to vector<4x16xf32>
    %cst_106 = arith.constant dense<0.000000e+00> : vector<4x16xf32>
    %150 = tpu.matmul %35, %149, %cst_106 {dimension_numbers = #tpu.dot_dimension_numbers<[1], [0], [0], [1], [0, 0, 1, 1], [], []>} : vector<4x4xf32>, vector<4x16xf32>, vector<4x16xf32> -> vector<4x16xf32>
    %151 = arith.addf %148, %150 : vector<4x16xf32>
    %152 = vector.extract_strided_slice %140 {offsets = [0, 5], sizes = [4, 16], strides = [1, 1]} : vector<4x24xf32> to vector<4x16xf32>
    %cst_107 = arith.constant dense<0.000000e+00> : vector<4x16xf32>
    %153 = tpu.matmul %37, %152, %cst_107 {dimension_numbers = #tpu.dot_dimension_numbers<[1], [0], [0], [1], [0, 0, 1, 1], [], []>} : vector<4x4xf32>, vector<4x16xf32>, vector<4x16xf32> -> vector<4x16xf32>
    %154 = arith.addf %151, %153 : vector<4x16xf32>
    %155 = vector.extract_strided_slice %140 {offsets = [0, 6], sizes = [4, 16], strides = [1, 1]} : vector<4x24xf32> to vector<4x16xf32>
    %cst_108 = arith.constant dense<0.000000e+00> : vector<4x16xf32>
    %156 = tpu.matmul %39, %155, %cst_108 {dimension_numbers = #tpu.dot_dimension_numbers<[1], [0], [0], [1], [0, 0, 1, 1], [], []>} : vector<4x4xf32>, vector<4x16xf32>, vector<4x16xf32> -> vector<4x16xf32>
    %157 = arith.addf %154, %156 : vector<4x16xf32>
    %158 = vector.extract_strided_slice %140 {offsets = [0, 7], sizes = [4, 16], strides = [1, 1]} : vector<4x24xf32> to vector<4x16xf32>
    %cst_109 = arith.constant dense<0.000000e+00> : vector<4x16xf32>
    %159 = tpu.matmul %41, %158, %cst_109 {dimension_numbers = #tpu.dot_dimension_numbers<[1], [0], [0], [1], [0, 0, 1, 1], [], []>} : vector<4x4xf32>, vector<4x16xf32>, vector<4x16xf32> -> vector<4x16xf32>
    %160 = arith.addf %157, %159 : vector<4x16xf32>
    %161 = vector.broadcast %43 : vector<4x1xf32> to vector<4x16xf32>
    %162 = arith.addf %160, %161 : vector<4x16xf32>
    %cst_110 = arith.constant dense<0.000000e+00> : vector<4xf32>
    %163 = vector.multi_reduction <add>, %162, %cst_110 [1] : vector<4x16xf32> to vector<4xf32>
    %164 = vector.shape_cast %163 : vector<4xf32> to vector<4x1xf32>
    %cst_111 = arith.constant 1.600000e+01 : f32
    %165 = vector.broadcast %cst_111 : f32 to vector<4x1xf32>
    %166 = arith.divf %164, %165 : vector<4x1xf32>
    %167 = arith.mulf %45, %166 : vector<4x1xf32>
    %cst_112 = arith.constant dense<0.000000e+00> : vector<1xf32>
    %168 = vector.multi_reduction <add>, %167, %cst_112 [0] : vector<4x1xf32> to vector<1xf32>
    %169 = vector.shape_cast %168 : vector<1xf32> to vector<1x1xf32>
    %cst_113 = arith.constant 0.000000e+00 : f32
    %170 = vector.broadcast %cst_113 : f32 to vector<1x1xf32>
    %171 = arith.maximumf %169, %170 : vector<1x1xf32>
    %172 = vector.broadcast %171 : vector<1x1xf32> to vector<4x1xf32>
    %173 = arith.mulf %47, %172 : vector<4x1xf32>
    %cst_114 = arith.constant dense<0.000000e+00> : vector<4xf32>
    %174 = vector.multi_reduction <add>, %173, %cst_114 [1] : vector<4x1xf32> to vector<4xf32>
    %175 = vector.shape_cast %174 : vector<4xf32> to vector<4x1xf32>
    %176 = arith.negf %175 : vector<4x1xf32>
    %177 = math.exp %176 : vector<4x1xf32>
    %cst_115 = arith.constant 1.000000e+00 : f32
    %178 = vector.broadcast %cst_115 : f32 to vector<4x1xf32>
    %179 = arith.addf %178, %177 : vector<4x1xf32>
    %180 = arith.divf %178, %179 : vector<4x1xf32>
    %181 = math.exp %180 : vector<4x1xf32>
    %182 = vector.extract_strided_slice %73 {offsets = [12, 0], sizes = [4, 24], strides = [1, 1]} : vector<16x24xf32> to vector<4x24xf32>
    %183 = vector.extract_strided_slice %182 {offsets = [0, 0], sizes = [4, 16], strides = [1, 1]} : vector<4x24xf32> to vector<4x16xf32>
    %cst_116 = arith.constant dense<0.000000e+00> : vector<4x16xf32>
    %184 = tpu.matmul %49, %183, %cst_116 {dimension_numbers = #tpu.dot_dimension_numbers<[1], [0], [0], [1], [0, 0, 1, 1], [], []>} : vector<4x4xf32>, vector<4x16xf32>, vector<4x16xf32> -> vector<4x16xf32>
    %185 = vector.extract_strided_slice %182 {offsets = [0, 1], sizes = [4, 16], strides = [1, 1]} : vector<4x24xf32> to vector<4x16xf32>
    %cst_117 = arith.constant dense<0.000000e+00> : vector<4x16xf32>
    %186 = tpu.matmul %51, %185, %cst_117 {dimension_numbers = #tpu.dot_dimension_numbers<[1], [0], [0], [1], [0, 0, 1, 1], [], []>} : vector<4x4xf32>, vector<4x16xf32>, vector<4x16xf32> -> vector<4x16xf32>
    %187 = arith.addf %184, %186 : vector<4x16xf32>
    %188 = vector.extract_strided_slice %182 {offsets = [0, 2], sizes = [4, 16], strides = [1, 1]} : vector<4x24xf32> to vector<4x16xf32>
    %cst_118 = arith.constant dense<0.000000e+00> : vector<4x16xf32>
    %189 = tpu.matmul %53, %188, %cst_118 {dimension_numbers = #tpu.dot_dimension_numbers<[1], [0], [0], [1], [0, 0, 1, 1], [], []>} : vector<4x4xf32>, vector<4x16xf32>, vector<4x16xf32> -> vector<4x16xf32>
    %190 = arith.addf %187, %189 : vector<4x16xf32>
    %191 = vector.extract_strided_slice %182 {offsets = [0, 3], sizes = [4, 16], strides = [1, 1]} : vector<4x24xf32> to vector<4x16xf32>
    %cst_119 = arith.constant dense<0.000000e+00> : vector<4x16xf32>
    %192 = tpu.matmul %55, %191, %cst_119 {dimension_numbers = #tpu.dot_dimension_numbers<[1], [0], [0], [1], [0, 0, 1, 1], [], []>} : vector<4x4xf32>, vector<4x16xf32>, vector<4x16xf32> -> vector<4x16xf32>
    %193 = arith.addf %190, %192 : vector<4x16xf32>
    %194 = vector.extract_strided_slice %182 {offsets = [0, 4], sizes = [4, 16], strides = [1, 1]} : vector<4x24xf32> to vector<4x16xf32>
    %cst_120 = arith.constant dense<0.000000e+00> : vector<4x16xf32>
    %195 = tpu.matmul %57, %194, %cst_120 {dimension_numbers = #tpu.dot_dimension_numbers<[1], [0], [0], [1], [0, 0, 1, 1], [], []>} : vector<4x4xf32>, vector<4x16xf32>, vector<4x16xf32> -> vector<4x16xf32>
    %196 = arith.addf %193, %195 : vector<4x16xf32>
    %197 = vector.extract_strided_slice %182 {offsets = [0, 5], sizes = [4, 16], strides = [1, 1]} : vector<4x24xf32> to vector<4x16xf32>
    %cst_121 = arith.constant dense<0.000000e+00> : vector<4x16xf32>
    %198 = tpu.matmul %59, %197, %cst_121 {dimension_numbers = #tpu.dot_dimension_numbers<[1], [0], [0], [1], [0, 0, 1, 1], [], []>} : vector<4x4xf32>, vector<4x16xf32>, vector<4x16xf32> -> vector<4x16xf32>
    %199 = arith.addf %196, %198 : vector<4x16xf32>
    %200 = vector.extract_strided_slice %182 {offsets = [0, 6], sizes = [4, 16], strides = [1, 1]} : vector<4x24xf32> to vector<4x16xf32>
    %cst_122 = arith.constant dense<0.000000e+00> : vector<4x16xf32>
    %201 = tpu.matmul %61, %200, %cst_122 {dimension_numbers = #tpu.dot_dimension_numbers<[1], [0], [0], [1], [0, 0, 1, 1], [], []>} : vector<4x4xf32>, vector<4x16xf32>, vector<4x16xf32> -> vector<4x16xf32>
    %202 = arith.addf %199, %201 : vector<4x16xf32>
    %203 = vector.extract_strided_slice %182 {offsets = [0, 7], sizes = [4, 16], strides = [1, 1]} : vector<4x24xf32> to vector<4x16xf32>
    %cst_123 = arith.constant dense<0.000000e+00> : vector<4x16xf32>
    %204 = tpu.matmul %63, %203, %cst_123 {dimension_numbers = #tpu.dot_dimension_numbers<[1], [0], [0], [1], [0, 0, 1, 1], [], []>} : vector<4x4xf32>, vector<4x16xf32>, vector<4x16xf32> -> vector<4x16xf32>
    %205 = arith.addf %202, %204 : vector<4x16xf32>
    %206 = vector.extract_strided_slice %182 {offsets = [0, 8], sizes = [4, 16], strides = [1, 1]} : vector<4x24xf32> to vector<4x16xf32>
    %cst_124 = arith.constant dense<0.000000e+00> : vector<4x16xf32>
    %207 = tpu.matmul %65, %206, %cst_124 {dimension_numbers = #tpu.dot_dimension_numbers<[1], [0], [0], [1], [0, 0, 1, 1], [], []>} : vector<4x4xf32>, vector<4x16xf32>, vector<4x16xf32> -> vector<4x16xf32>
    %208 = arith.addf %205, %207 : vector<4x16xf32>
    %209 = vector.broadcast %67 : vector<4x1xf32> to vector<4x16xf32>
    %210 = arith.addf %208, %209 : vector<4x16xf32>
    %cst_125 = arith.constant dense<0.000000e+00> : vector<4xf32>
    %211 = vector.multi_reduction <add>, %210, %cst_125 [1] : vector<4x16xf32> to vector<4xf32>
    %212 = vector.shape_cast %211 : vector<4xf32> to vector<4x1xf32>
    %cst_126 = arith.constant 1.600000e+01 : f32
    %213 = vector.broadcast %cst_126 : f32 to vector<4x1xf32>
    %214 = arith.divf %212, %213 : vector<4x1xf32>
    %215 = arith.mulf %69, %214 : vector<4x1xf32>
    %cst_127 = arith.constant dense<0.000000e+00> : vector<1xf32>
    %216 = vector.multi_reduction <add>, %215, %cst_127 [0] : vector<4x1xf32> to vector<1xf32>
    %217 = vector.shape_cast %216 : vector<1xf32> to vector<1x1xf32>
    %cst_128 = arith.constant 0.000000e+00 : f32
    %218 = vector.broadcast %cst_128 : f32 to vector<1x1xf32>
    %219 = arith.maximumf %217, %218 : vector<1x1xf32>
    %220 = vector.broadcast %219 : vector<1x1xf32> to vector<4x1xf32>
    %221 = arith.mulf %71, %220 : vector<4x1xf32>
    %cst_129 = arith.constant dense<0.000000e+00> : vector<4xf32>
    %222 = vector.multi_reduction <add>, %221, %cst_129 [1] : vector<4x1xf32> to vector<4xf32>
    %223 = vector.shape_cast %222 : vector<4xf32> to vector<4x1xf32>
    %224 = arith.negf %223 : vector<4x1xf32>
    %225 = math.exp %224 : vector<4x1xf32>
    %cst_130 = arith.constant 1.000000e+00 : f32
    %226 = vector.broadcast %cst_130 : f32 to vector<4x1xf32>
    %227 = arith.addf %226, %225 : vector<4x1xf32>
    %228 = arith.divf %226, %227 : vector<4x1xf32>
    %229 = math.exp %228 : vector<4x1xf32>
    %230 = arith.addf %103, %139 : vector<4x1xf32>
    %231 = arith.addf %230, %181 : vector<4x1xf32>
    %232 = arith.addf %231, %229 : vector<4x1xf32>
    %cst_131 = arith.constant 1.000000e+00 : f32
    %233 = vector.broadcast %cst_131 : f32 to vector<4x1xf32>
    %234 = arith.divf %233, %232 : vector<4x1xf32>
    %235 = arith.mulf %103, %234 : vector<4x1xf32>
    %236 = vector.broadcast %235 : vector<4x1xf32> to vector<4x16xf32>
    %237 = arith.mulf %84, %236 : vector<4x16xf32>
    %238 = arith.mulf %139, %234 : vector<4x1xf32>
    %239 = vector.broadcast %238 : vector<4x1xf32> to vector<4x16xf32>
    %240 = arith.mulf %120, %239 : vector<4x16xf32>
    %241 = arith.mulf %181, %234 : vector<4x1xf32>
    %242 = vector.broadcast %241 : vector<4x1xf32> to vector<4x16xf32>
    %243 = arith.mulf %162, %242 : vector<4x16xf32>
    %244 = arith.mulf %229, %234 : vector<4x1xf32>
    %245 = vector.broadcast %244 : vector<4x1xf32> to vector<4x16xf32>
    %246 = arith.mulf %210, %245 : vector<4x16xf32>
    %247 = tpu.concatenate %237, %240, %243, %246 in 0 : vector<4x16xf32>, vector<4x16xf32>, vector<4x16xf32>, vector<4x16xf32> -> vector<16x16xf32>
    %c0_132 = arith.constant 0 : index
    %c0_133 = arith.constant 0 : index
    %c0_134 = arith.constant 0 : index
    %248 = vector.load %arg6[%c0_132, %c0_133, %c0_134] : memref<1x16x16xf32, #tpu.memory_space<vmem>>, vector<1x16x16xf32>
    %249 = vector.shape_cast %248 : vector<1x16x16xf32> to vector<16x16xf32>
    %250 = vector.shape_cast %247 : vector<16x16xf32> to vector<1x16x16xf32>
    tpu.vector_store %arg6[%c0_132, %c0_133, %c0_134], %250 {strides = array<i32>} : memref<1x16x16xf32, #tpu.memory_space<vmem>>, vector<1x16x16xf32>,
    return
  }
  func.func @transform_0(%arg0: i32) -> (i32, i32, i32) {
    %c0_i32 = arith.constant 0 : i32
    %c0_i32_0 = arith.constant 0 : i32
    %c0_i32_1 = arith.constant 0 : i32
    return %arg0, %c0_i32, %c0_i32_0 : i32, i32, i32
  }
  func.func @transform_1(%arg0: i32) -> (i32, i32, i32) {
    %c0_i32 = arith.constant 0 : i32
    %c0_i32_0 = arith.constant 0 : i32
    %c0_i32_1 = arith.constant 0 : i32
    %c0_i32_2 = arith.constant 0 : i32
    return %c0_i32, %c0_i32_0, %c0_i32_1 : i32, i32, i32
  }
  func.func @transform_2(%arg0: i32) -> (i32, i32, i32) {
    %c0_i32 = arith.constant 0 : i32
    %c0_i32_0 = arith.constant 0 : i32
    %c0_i32_1 = arith.constant 0 : i32
    %c0_i32_2 = arith.constant 0 : i32
    return %c0_i32, %c0_i32_0, %c0_i32_1 : i32, i32, i32
  }
  func.func @transform_3(%arg0: i32) -> (i32, i32, i32) {
    %c0_i32 = arith.constant 0 : i32
    %c0_i32_0 = arith.constant 0 : i32
    %c0_i32_1 = arith.constant 0 : i32
    %c0_i32_2 = arith.constant 0 : i32
    return %c0_i32, %c0_i32_0, %c0_i32_1 : i32, i32, i32
  }
  func.func @transform_4(%arg0: i32) -> (i32, i32, i32) {
    %c0_i32 = arith.constant 0 : i32
    %c0_i32_0 = arith.constant 0 : i32
    %c0_i32_1 = arith.constant 0 : i32
    %c0_i32_2 = arith.constant 0 : i32
    return %c0_i32, %c0_i32_0, %c0_i32_1 : i32, i32, i32
  }
  func.func @transform_5(%arg0: i32) -> (i32, i32, i32) {
    %c0_i32 = arith.constant 0 : i32
    %c0_i32_0 = arith.constant 0 : i32
    %c0_i32_1 = arith.constant 0 : i32
    return %arg0, %c0_i32, %c0_i32_0 : i32, i32, i32
  }
}

</mosaic_0001>

<llo_original>
// kernel: tpu_custom_call.1
$region0: #{tpu_custom_call.1}
  #allocation0 [shape = 'u32[]', space=smem, size = 0x4, offset = 0x4, fixed_abs, tag = 'smem constant byte address 0x4 - core index']
  #allocation1 [shape = 'u32[72,128]{1,0:T(1,128)}', space=vmem, size = 0x9000, scoped, tag = 'internal scratch']
  %s0 = inlined_call_operand.vmem [shape: f32[2,16,24], index: 0, kind: input, shape index: {}]
  %s1 = inlined_call_operand.vmem [shape: f32[36,4,4], index: 1, kind: input, shape index: {}]
  %s2 = inlined_call_operand.vmem [shape: f32[4,4,1], index: 2, kind: input, shape index: {}]
  %s3 = inlined_call_operand.vmem [shape: f32[4,4,1], index: 3, kind: input, shape index: {}]
  %s4 = inlined_call_operand.vmem [shape: f32[4,4,1], index: 4, kind: input, shape index: {}]
  %s5 = inlined_call_operand.hbm [shape: f32[2,16,16], index: 5, kind: output, shape index: {}]
  %s6 = sld [smem:[#allocation0]]
  $region53: #{tpu_custom_call.1} parent=0
    _
  %s8 = ssub.s32 1, %s6
  %s9 = scalar_select 0, %s8, %s6
  $region1: #{tpu_custom_call.1} parent=0
    #allocation2 [shape = 'u8[16384]{0}', space=vmem, size = 0x4000, scoped, tag = 'output window, operand 0']
    #allocation3 [shape = 's32[2]{0}', space=sflag, size = 0x8, scoped, tag = 'scoped memory for tpu_custom_call.1']
    %10 = vsyncpa [#allocation3], 0
    %s11 = scalar_lea.sflag [#allocation3], 1
    %12 = vsyncpa %s11, 0
    loop: start=0, step=1, limit=4
    $region2: #{tpu_custom_call.1} parent=1 // loop_pre_header
      _
    $region3: #{tpu_custom_call.1} parent=1 // loop_header
      %s14 = sphi 0, %s18
      %p15 = scmp.ge.s32.totalorder %s14, 4
      %s24 = sphi 0, %s26
      %s27 = sphi 0, %s24
      %s28 = sphi 0, %s27
      %s44 = sphi 0, %s28
      %s48 = sphi 0, %s48
      %s50 = sphi 0, %s48
      %s51 = sphi 0, %s50
      %s65 = sphi 0, %s51
      %s69 = sphi 0, %s69
      %s71 = sphi 0, %s69
      %s72 = sphi 0, %s71
      %s86 = sphi 0, %s72
      %s90 = sphi 0, %s90
      %s92 = sphi 0, %s90
      %s93 = sphi 0, %s92
      %s107 = sphi 0, %s93
      %s111 = sphi 0, %s111
      %s113 = sphi 0, %s111
      %s114 = sphi 0, %s113
      %s128 = sphi 0, %s114
      %s134 = sphi 0, %s136
      %s137 = sphi 0, %s134
      %s138 = sphi 0, %s137
      %s154 = sphi 0, %s138
    $region4: #{tpu_custom_call.1} parent=1 // loop_header_branch
      %17 = sbr.rel (%p15) target = $region8
    $region5: #{tpu_custom_call.1} parent=1 // loop_body
      %s19 = ssub.s32 %s14, 1
      %s20 = ssub.s32 %s14, 2
      %s21 = sadd.s32 %s14, 1
      %s22 = ssub.s32 %s14, %s21
      %p23 = scmp.eq.s32.totalorder %s22, 0
      %s25 = sadd.s32 %s24, 1
      %s26 = scalar_select %p23, %s24, %s25
      %p29 = pneg %p23
      %p30 = scmp.eq.s32.totalorder %s14, 1
      %p31 = por %p29, %p30
      %p32 = scmp.ne.s32.totalorder %s24, %s27
      %p33 = scmp.eq.s32.totalorder %s14, 0
      %p34 = por %p32, %p33
      %p35 = scmp.ne.s32.totalorder %s24, %s27
      %p36 = scmp.eq.s32.totalorder %s19, 1
      %p37 = por %p35, %p36
      %p38 = scmp.ne.s32.totalorder %s27, %s28
      %p39 = scmp.eq.s32.totalorder %s19, 0
      %p40 = por %p38, %p39
      %p41 = scmp.ne.s32.totalorder %s27, %s28
      %p42 = scmp.eq.s32.totalorder %s20, 1
      %p43 = por %p41, %p42
      %p45 = scmp.ne.s32.totalorder %s28, %s44
      %p46 = scmp.eq.s32.totalorder %s20, 0
      %p47 = por %p45, %p46
      %s49 = sadd.s32 %s48, 1
      %p52 = scmp.eq.s32.totalorder %s14, 1
      %p53 = scmp.ne.s32.totalorder %s48, %s50
      %p54 = scmp.eq.s32.totalorder %s14, 0
      %p55 = por %p53, %p54
      %p56 = scmp.ne.s32.totalorder %s48, %s50
      %p57 = scmp.eq.s32.totalorder %s19, 1
      %p58 = por %p56, %p57
      %p59 = scmp.ne.s32.totalorder %s50, %s51
      %p60 = scmp.eq.s32.totalorder %s19, 0
      %p61 = por %p59, %p60
      %p62 = scmp.ne.s32.totalorder %s50, %s51
      %p63 = scmp.eq.s32.totalorder %s20, 1
      %p64 = por %p62, %p63
      %p66 = scmp.ne.s32.totalorder %s51, %s65
      %p67 = scmp.eq.s32.totalorder %s20, 0
      %p68 = por %p66, %p67
      %s70 = sadd.s32 %s69, 1
      %p73 = scmp.eq.s32.totalorder %s14, 1
      %p74 = scmp.ne.s32.totalorder %s69, %s71
      %p75 = scmp.eq.s32.totalorder %s14, 0
      %p76 = por %p74, %p75
      %p77 = scmp.ne.s32.totalorder %s69, %s71
      %p78 = scmp.eq.s32.totalorder %s19, 1
      %p79 = por %p77, %p78
      %p80 = scmp.ne.s32.totalorder %s71, %s72
      %p81 = scmp.eq.s32.totalorder %s19, 0
      %p82 = por %p80, %p81
      %p83 = scmp.ne.s32.totalorder %s71, %s72
      %p84 = scmp.eq.s32.totalorder %s20, 1
      %p85 = por %p83, %p84
      %p87 = scmp.ne.s32.totalorder %s72, %s86
      %p88 = scmp.eq.s32.totalorder %s20, 0
      %p89 = por %p87, %p88
      %s91 = sadd.s32 %s90, 1
      %p94 = scmp.eq.s32.totalorder %s14, 1
      %p95 = scmp.ne.s32.totalorder %s90, %s92
      %p96 = scmp.eq.s32.totalorder %s14, 0
      %p97 = por %p95, %p96
      %p98 = scmp.ne.s32.totalorder %s90, %s92
      %p99 = scmp.eq.s32.totalorder %s19, 1
      %p100 = por %p98, %p99
      %p101 = scmp.ne.s32.totalorder %s92, %s93
      %p102 = scmp.eq.s32.totalorder %s19, 0
      %p103 = por %p101, %p102
      %p104 = scmp.ne.s32.totalorder %s92, %s93
      %p105 = scmp.eq.s32.totalorder %s20, 1
      %p106 = por %p104, %p105
      %p108 = scmp.ne.s32.totalorder %s93, %s107
      %p109 = scmp.eq.s32.totalorder %s20, 0
      %p110 = por %p108, %p109
      %s112 = sadd.s32 %s111, 1
      %p115 = scmp.eq.s32.totalorder %s14, 1
      %p116 = scmp.ne.s32.totalorder %s111, %s113
      %p117 = scmp.eq.s32.totalorder %s14, 0
      %p118 = por %p116, %p117
      %p119 = scmp.ne.s32.totalorder %s111, %s113
      %p120 = scmp.eq.s32.totalorder %s19, 1
      %p121 = por %p119, %p120
      %p122 = scmp.ne.s32.totalorder %s113, %s114
      %p123 = scmp.eq.s32.totalorder %s19, 0
      %p124 = por %p122, %p123
      %p125 = scmp.ne.s32.totalorder %s113, %s114
      %p126 = scmp.eq.s32.totalorder %s20, 1
      %p127 = por %p125, %p126
      %p129 = scmp.ne.s32.totalorder %s114, %s128
      %p130 = scmp.eq.s32.totalorder %s20, 0
      %p131 = por %p129, %p130
      %s132 = ssub.s32 %s14, %s21
      %p133 = scmp.eq.s32.totalorder %s132, 0
      %s135 = sadd.s32 %s134, 1
      %s136 = scalar_select %p133, %s134, %s135
      %p139 = pneg %p133
      %p140 = scmp.eq.s32.totalorder %s14, 1
      %p141 = por %p139, %p140
      %p142 = scmp.ne.s32.totalorder %s134, %s137
      %p143 = scmp.eq.s32.totalorder %s14, 0
      %p144 = por %p142, %p143
      %p145 = scmp.ne.s32.totalorder %s134, %s137
      %p146 = scmp.eq.s32.totalorder %s19, 1
      %p147 = por %p145, %p146
      %p148 = scmp.ne.s32.totalorder %s137, %s138
      %p149 = scmp.eq.s32.totalorder %s19, 0
      %p150 = por %p148, %p149
      %p151 = scmp.ne.s32.totalorder %s137, %s138
      %p152 = scmp.eq.s32.totalorder %s20, 1
      %p153 = por %p151, %p152
      %p155 = scmp.ne.s32.totalorder %s138, %s154
      %p156 = scmp.eq.s32.totalorder %s20, 0
      %p157 = por %p155, %p156
      %p158 = scmp.le.s32.totalorder 1, %s14
      %p159 = scmp.lt.s32.totalorder %s14, 3
      %p160 = pnand %p158, %p159
      %p161 = pneg %p160
      // Predicated region
      $region9: #{tpu_custom_call.1} parent=5 // pred_check
        _
      $region10: #{tpu_custom_call.1} parent=5 // pred_check_branch
        %163 = sbr.rel (%p160) target = $region12
      $region11: #{tpu_custom_call.1} parent=5 // pred_region
        %s164 = ssub.s32 %s14, 1
        // Predicated region
        $region13: #{tpu_custom_call.1} parent=11 // pred_check
          %p165 = pneg %p61
        $region14: #{tpu_custom_call.1} parent=11 // pred_check_branch
          %167 = sbr.rel (%p165) target = $region16
        $region15: #{tpu_custom_call.1} parent=11 // pred_region
          _
        $region16: #{tpu_custom_call.1} parent=11 // pred_fallthru
          _
        // Predicated region
        $region17: #{tpu_custom_call.1} parent=11 // pred_check
          %p168 = pneg %p82
        $region18: #{tpu_custom_call.1} parent=11 // pred_check_branch
          %170 = sbr.rel (%p168) target = $region20
        $region19: #{tpu_custom_call.1} parent=11 // pred_region
          _
        $region20: #{tpu_custom_call.1} parent=11 // pred_fallthru
          _
        // Predicated region
        $region21: #{tpu_custom_call.1} parent=11 // pred_check
          %p171 = pneg %p103
        $region22: #{tpu_custom_call.1} parent=11 // pred_check_branch
          %173 = sbr.rel (%p171) target = $region24
        $region23: #{tpu_custom_call.1} parent=11 // pred_region
          _
        $region24: #{tpu_custom_call.1} parent=11 // pred_fallthru
          _
        // Predicated region
        $region25: #{tpu_custom_call.1} parent=11 // pred_check
          %p174 = pneg %p124
        $region26: #{tpu_custom_call.1} parent=11 // pred_check_branch
          %176 = sbr.rel (%p174) target = $region28
        $region27: #{tpu_custom_call.1} parent=11 // pred_region
          _
        $region28: #{tpu_custom_call.1} parent=11 // pred_fallthru
          _
      $region12: #{tpu_custom_call.1} parent=5 // pred_fallthru
        _
      %p177 = scmp.lt.s32.totalorder %s14, 2
      // Predicated region
      $region29: #{tpu_custom_call.1} parent=5 // pred_check
        %p178 = pneg %p177
      $region30: #{tpu_custom_call.1} parent=5 // pred_check_branch
        %180 = sbr.rel (%p178) target = $region32
      $region31: #{tpu_custom_call.1} parent=5 // pred_region
        // Predicated region
        $region33: #{tpu_custom_call.1} parent=31 // pred_check
          %p181 = pneg %p34
        $region34: #{tpu_custom_call.1} parent=31 // pred_check_branch
          %183 = sbr.rel (%p181) target = $region36
        $region35: #{tpu_custom_call.1} parent=31 // pred_region
          %p184 = scmp.lt.s32.totalorder %s14, 1
          %s185 = scalar_select %p184, %s14, 1
          %s186 = smul.addr %s185, 2
          %s187 = smul.addr %s186, 8
          %s188 = scalar_lea.vmem %s0, %s187
        $region36: #{tpu_custom_call.1} parent=31 // pred_fallthru
          _
      $region32: #{tpu_custom_call.1} parent=5 // pred_fallthru
        _
      %p189 = scmp.le.s32.totalorder 1, %s14
      %p190 = scmp.lt.s32.totalorder %s14, 3
      %p191 = pnand %p189, %p190
      %p192 = pneg %p191
      // Predicated region
      $region37: #{tpu_custom_call.1} parent=5 // pred_check
        _
      $region38: #{tpu_custom_call.1} parent=5 // pred_check_branch
        %194 = sbr.rel (%p191) target = $region40
      $region39: #{tpu_custom_call.1} parent=5 // pred_region
        %s195 = ssub.s32 %s14, 1
        %p196 = scmp.lt.s32.totalorder %s19, 1
        %s197 = scalar_select %p196, %s19, 1
        %s198 = smul.addr %s197, 2
        %s199 = smul.addr %s198, 8
        %s200 = scalar_lea.vmem %s0, %s199
        %p201 = pneg %p40
        %p202 = pneg %p37
        %p203 = pneg %p61
        %p204 = pneg %p58
        %p205 = pneg %p82
        %p206 = pneg %p79
        %p207 = pneg %p103
        %p208 = pneg %p100
        %p209 = pneg %p124
        %p210 = pneg %p121
        %p211 = pneg %p150
        %p212 = pneg %p147
        %s213 = sand.u32 %s137, 1
        %s214 = scalar_lea.sflag [#allocation3], %s213
        %s215 = sand.u32 %s137, 1
        %s216 = smul.addr %s215, 16
        %s217 = scalar_lea.vmem [#allocation2], %s216
        %p218 = scmp.lt.s32.totalorder %s19, 1
        %s219 = scalar_select %p218, %s19, 1
        %s220 = smul.addr %s219, 2
        %s221 = smul.addr %s220, 8
        %s222 = scalar_lea.vmem %s0, %s221
        %s223 = scalar_lea.vmem %s1, 12
        %v224 = vld [vmem:[%s223] sm:$0xf]
        %s225 = scalar_lea.vmem %s1, 16
        %v226 = vld [vmem:[%s225] sm:$0xf]
        %s227 = scalar_lea.vmem %s1, 20
        %v228 = vld [vmem:[%s227] sm:$0xf]
        %v229 = vld [vmem:[%s2] sm:$0xf]
        %v230 = vld [vmem:[%s3] sm:$0xf]
        %v231 = vld [vmem:[%s4] sm:$0xf]
        %s232 = scalar_lea.vmem %s1, 44
        %v233 = vld [vmem:[%s232] sm:$0xf]
        %s234 = scalar_lea.vmem %s1, 48
        %v235 = vld [vmem:[%s234] sm:$0xf]
        %s236 = scalar_lea.vmem %s1, 52
        %v237 = vld [vmem:[%s236] sm:$0xf]
        %s238 = scalar_lea.vmem %s1, 56
        %v239 = vld [vmem:[%s238] sm:$0xf]
        %s240 = scalar_lea.vmem %s1, 60
        %v241 = vld [vmem:[%s240] sm:$0xf]
        %s242 = scalar_lea.vmem %s2, 4
        %v243 = vld [vmem:[%s242] sm:$0xf]
        %s244 = scalar_lea.vmem %s3, 4
        %v245 = vld [vmem:[%s244] sm:$0xf]
        %s246 = scalar_lea.vmem %s4, 4
        %v247 = vld [vmem:[%s246] sm:$0xf]
        %s248 = scalar_lea.vmem %s1, 76
        %v249 = vld [vmem:[%s248] sm:$0xf]
        %s250 = scalar_lea.vmem %s1, 80
        %v251 = vld [vmem:[%s250] sm:$0xf]
        %s252 = scalar_lea.vmem %s1, 84
        %v253 = vld [vmem:[%s252] sm:$0xf]
        %s254 = scalar_lea.vmem %s1, 88
        %v255 = vld [vmem:[%s254] sm:$0xf]
        %s256 = scalar_lea.vmem %s1, 92
        %v257 = vld [vmem:[%s256] sm:$0xf]
        %s258 = scalar_lea.vmem %s1, 96
        %v259 = vld [vmem:[%s258] sm:$0xf]
        %s260 = scalar_lea.vmem %s1, 100
        %v261 = vld [vmem:[%s260] sm:$0xf]
        %s262 = scalar_lea.vmem %s2, 8
        %v263 = vld [vmem:[%s262] sm:$0xf]
        %s264 = scalar_lea.vmem %s3, 8
        %v265 = vld [vmem:[%s264] sm:$0xf]
        %s266 = scalar_lea.vmem %s4, 8
        %v267 = vld [vmem:[%s266] sm:$0xf]
        %s268 = scalar_lea.vmem %s1, 108
        %v269 = vld [vmem:[%s268] sm:$0xf]
        %s270 = scalar_lea.vmem %s1, 112
        %v271 = vld [vmem:[%s270] sm:$0xf]
        %s272 = scalar_lea.vmem %s1, 116
        %v273 = vld [vmem:[%s272] sm:$0xf]
        %s274 = scalar_lea.vmem %s1, 120
        %v275 = vld [vmem:[%s274] sm:$0xf]
        %s276 = scalar_lea.vmem %s1, 124
        %v277 = vld [vmem:[%s276] sm:$0xf]
        %s278 = scalar_lea.vmem %s1, 128
        %v279 = vld [vmem:[%s278] sm:$0xf]
        %s280 = scalar_lea.vmem %s1, 132
        %v281 = vld [vmem:[%s280] sm:$0xf]
        %s282 = scalar_lea.vmem %s1, 136
        %v283 = vld [vmem:[%s282] sm:$0xf]
        %s284 = scalar_lea.vmem %s1, 140
        %v285 = vld [vmem:[%s284] sm:$0xf]
        %s286 = scalar_lea.vmem %s2, 12
        %v287 = vld [vmem:[%s286] sm:$0xf]
        %s288 = scalar_lea.vmem %s3, 12
        %v289 = vld [vmem:[%s288] sm:$0xf]
        %s290 = scalar_lea.vmem %s4, 12
        %v291 = vld [vmem:[%s290] sm:$0xf]
        %v292 = vld [vmem:[%s222] sm:$0xff]
        %v293 = vld [vmem:[%s222 + $0x8] sm:$0xff]
        %295 = vrot.lane.b32.xlu0 %v292, 124
        %v296 = vpop.permute.xlu0 %295
        %vm297 = vcmask 31744
        %v299 = vsel %vm297, %v226, 0
        %vm301 = vcmask 1043456
        %v302 = vsel %vm301, %v296, 0
        %304 = vmatpush.msra.mxu0 0.0
        %305 = vmatpush.msra.mxu0 0.0
        %306 = vmatpush.msra.mxu0 0.0
        %307 = vmatpush.msra.mxu0 0.0
        %308 = vmatpush.msra.mxu0 0.0
        %309 = vmatpush.msra.mxu0 0.0
        %310 = vmatpush.msra.mxu0 0.0
        %311 = vmatpush.msra.mxu0 0.0
        %312 = vmatpush.msra.mxu0 0.0
        %313 = vmatpush.msra.mxu0 0.0
        %314 = vmatpush.msra.mxu0 0.0
        %315 = vmatpush.msra.mxu0 0.0
        %316 = vmatpush.msra.mxu0 0.0
        %317 = vmatpush.msra.mxu0 0.0
        %318 = vmatpush.msra.mxu0 0.0
        %319 = vmatpush.msra.mxu0 %v302
        %320 = vmatmul.f32.gmra.mxu0 %v299
        %v321 = vpop.f32.mrf.mxu0
        %v322 = vadd.f32 0.0, %v321
        %323 = vdwg.mxu0
        %324 = vrot.lane.b32.xlu0 %v292, 125
        %v325 = vpop.permute.xlu0 %324
        %v327 = vsel %vm297, %v224, 0
        %v329 = vsel %vm301, %v325, 0
        %331 = vmatpush.msra.mxu0 0.0
        %332 = vmatpush.msra.mxu0 0.0
        %333 = vmatpush.msra.mxu0 0.0
        %334 = vmatpush.msra.mxu0 0.0
        %335 = vmatpush.msra.mxu0 0.0
        %336 = vmatpush.msra.mxu0 0.0
        %337 = vmatpush.msra.mxu0 0.0
        %338 = vmatpush.msra.mxu0 0.0
        %339 = vmatpush.msra.mxu0 0.0
        %340 = vmatpush.msra.mxu0 0.0
        %341 = vmatpush.msra.mxu0 0.0
        %342 = vmatpush.msra.mxu0 0.0
        %343 = vmatpush.msra.mxu0 0.0
        %344 = vmatpush.msra.mxu0 0.0
        %345 = vmatpush.msra.mxu0 0.0
        %346 = vmatpush.msra.mxu0 %v329
        %347 = vmatmul.f32.gmra.mxu0 %v327
        %v348 = vpop.f32.mrf.mxu0
        %v349 = vadd.f32 %v322, %v348
        %350 = vdwg.mxu0
        %351 = vrot.lane.b32.xlu0 %v292, 123
        %v352 = vpop.permute.xlu0 %351
        %v354 = vsel %vm297, %v228, 0
        %v356 = vsel %vm301, %v352, 0
        %358 = vmatpush.msra.mxu0 0.0
        %359 = vmatpush.msra.mxu0 0.0
        %360 = vmatpush.msra.mxu0 0.0
        %361 = vmatpush.msra.mxu0 0.0
        %362 = vmatpush.msra.mxu0 0.0
        %363 = vmatpush.msra.mxu0 0.0
        %364 = vmatpush.msra.mxu0 0.0
        %365 = vmatpush.msra.mxu0 0.0
        %366 = vmatpush.msra.mxu0 0.0
        %367 = vmatpush.msra.mxu0 0.0
        %368 = vmatpush.msra.mxu0 0.0
        %369 = vmatpush.msra.mxu0 0.0
        %370 = vmatpush.msra.mxu0 0.0
        %371 = vmatpush.msra.mxu0 0.0
        %372 = vmatpush.msra.mxu0 0.0
        %373 = vmatpush.msra.mxu0 %v356
        %374 = vmatmul.f32.gmra.mxu0 %v354
        %v375 = vpop.f32.mrf.mxu0
        %v376 = vadd.f32 0.0, %v375
        %377 = vdwg.mxu0
        %v378 = vadd.f32 %v349, %v376
        %380 = vset.pattern.permute.xlu0 0
        %381 = vperm.xlu0 %380, %v229
        %v382 = vpop.permute.xlu0 %381
        %v384 = vadd.f32 %v378, %v382
        %vm385 = vcmask 125952
        %v386 = vsel %vm385, %v384, 0.0
        %387 = vadd.xlane.f32.xlu0 %v386
        %v388 = vpop.xlane.xlu0 %387
        %v389 = vrcp.pop 16.0
        %v390 = vmul.f32 16.0, %v389
        %v391 = vsub.f32 1.0, %v390
        %v392 = vmul.f32 %v389, %v391
        %v393 = vadd.f32 %v389, %v392
        %vm394 = vweird.f32 %v389
        %v395 = vsel %vm394, %v389, %v393
        %v396 = vmul.f32 %v388, %v395
        %v397 = vmul.f32 %v230, %v396
        %vm398 = vcmask 3072
        %v399 = vsel %vm398, %v397, 0.0
        %v400 = vrot.slane %v399, 4
        %v401 = vadd.f32 %v399, %v400
        %v402 = vrot.slane %v401, 2
        %v403 = vadd.f32 %v401, %v402
        %v404 = vrot.slane %v403, 1
        %v405 = vadd.f32 %v403, %v404
        %v406 = vmax.f32 %v405, 0.0
        %v407 = vmul.f32 %v231, %v406
        %v408 = vadd.f32 %v407, 0.0
        %v409 = vxor.u32 %v408, 2147483648
        %v410 = vmul.f32 %v409, 1.442695
        %v411 = vpow.pop %v410
        %v412 = vadd.f32 %v411, 1.0
        %v413 = vrcp.pop %v412
        %v414 = vmul.f32 %v412, %v413
        %v415 = vsub.f32 1.0, %v414
        %v416 = vmul.f32 %v413, %v415
        %v417 = vadd.f32 %v413, %v416
        %vm418 = vweird.f32 %v412
        %vm419 = vweird.f32 %v413
        %vm420 = vmor %vm418, %vm419
        %v421 = vsel %vm420, %v413, %v417
        %v422 = vand.u32 2147483647, %v412
        %vm423 = vcmp.eq.f32.partialorder %v422, 8.507059e+37
        %v424 = vand.u32 %v412, 2147483648
        %v425 = vor.u32 1.1754944e-38, %v424
        %v426 = vsel %vm423, %v425, %v421
        %v427 = vmul.f32 1.0, %v426
        %v428 = vmul.f32 %v427, 1.442695
        %v429 = vpow.pop %v428
        %v430 = vrot.slane %v292, 4
        %431 = vrot.lane.b32.xlu0 %v430, 125
        %v432 = vpop.permute.xlu0 %431
        %v434 = vsel %vm297, %v235, 0
        %v436 = vsel %vm301, %v432, 0
        %438 = vmatpush.msra.mxu0 0.0
        %439 = vmatpush.msra.mxu0 0.0
        %440 = vmatpush.msra.mxu0 0.0
        %441 = vmatpush.msra.mxu0 0.0
        %442 = vmatpush.msra.mxu0 0.0
        %443 = vmatpush.msra.mxu0 0.0
        %444 = vmatpush.msra.mxu0 0.0
        %445 = vmatpush.msra.mxu0 0.0
        %446 = vmatpush.msra.mxu0 0.0
        %447 = vmatpush.msra.mxu0 0.0
        %448 = vmatpush.msra.mxu0 0.0
        %449 = vmatpush.msra.mxu0 0.0
        %450 = vmatpush.msra.mxu0 0.0
        %451 = vmatpush.msra.mxu0 0.0
        %452 = vmatpush.msra.mxu0 0.0
        %453 = vmatpush.msra.mxu0 %v436
        %454 = vmatmul.f32.gmra.mxu0 %v434
        %v455 = vpop.f32.mrf.mxu0
        %v456 = vadd.f32 0.0, %v455
        %457 = vdwg.mxu0
        %458 = vrot.lane.b32.xlu0 %v430, 126
        %v459 = vpop.permute.xlu0 %458
        %v461 = vsel %vm297, %v233, 0
        %v463 = vsel %vm301, %v459, 0
        %465 = vmatpush.msra.mxu0 0.0
        %466 = vmatpush.msra.mxu0 0.0
        %467 = vmatpush.msra.mxu0 0.0
        %468 = vmatpush.msra.mxu0 0.0
        %469 = vmatpush.msra.mxu0 0.0
        %470 = vmatpush.msra.mxu0 0.0
        %471 = vmatpush.msra.mxu0 0.0
        %472 = vmatpush.msra.mxu0 0.0
        %473 = vmatpush.msra.mxu0 0.0
        %474 = vmatpush.msra.mxu0 0.0
        %475 = vmatpush.msra.mxu0 0.0
        %476 = vmatpush.msra.mxu0 0.0
        %477 = vmatpush.msra.mxu0 0.0
        %478 = vmatpush.msra.mxu0 0.0
        %479 = vmatpush.msra.mxu0 0.0
        %480 = vmatpush.msra.mxu0 %v463
        %481 = vmatmul.f32.gmra.mxu0 %v461
        %v482 = vpop.f32.mrf.mxu0
        %v483 = vadd.f32 %v456, %v482
        %484 = vdwg.mxu0
        %485 = vrot.lane.b32.xlu0 %v430, 124
        %v486 = vpop.permute.xlu0 %485
        %v488 = vsel %vm297, %v237, 0
        %v490 = vsel %vm301, %v486, 0
        %492 = vmatpush.msra.mxu0 0.0
        %493 = vmatpush.msra.mxu0 0.0
        %494 = vmatpush.msra.mxu0 0.0
        %495 = vmatpush.msra.mxu0 0.0
        %496 = vmatpush.msra.mxu0 0.0
        %497 = vmatpush.msra.mxu0 0.0
        %498 = vmatpush.msra.mxu0 0.0
        %499 = vmatpush.msra.mxu0 0.0
        %500 = vmatpush.msra.mxu0 0.0
        %501 = vmatpush.msra.mxu0 0.0
        %502 = vmatpush.msra.mxu0 0.0
        %503 = vmatpush.msra.mxu0 0.0
        %504 = vmatpush.msra.mxu0 0.0
        %505 = vmatpush.msra.mxu0 0.0
        %506 = vmatpush.msra.mxu0 0.0
        %507 = vmatpush.msra.mxu0 %v490
        %508 = vmatmul.f32.gmra.mxu0 %v488
        %v509 = vpop.f32.mrf.mxu0
        %v510 = vadd.f32 0.0, %v509
        %511 = vdwg.mxu0
        %v512 = vadd.f32 %v483, %v510
        %513 = vrot.lane.b32.xlu0 %v430, 123
        %v514 = vpop.permute.xlu0 %513
        %v516 = vsel %vm297, %v239, 0
        %v518 = vsel %vm301, %v514, 0
        %520 = vmatpush.msra.mxu0 0.0
        %521 = vmatpush.msra.mxu0 0.0
        %522 = vmatpush.msra.mxu0 0.0
        %523 = vmatpush.msra.mxu0 0.0
        %524 = vmatpush.msra.mxu0 0.0
        %525 = vmatpush.msra.mxu0 0.0
        %526 = vmatpush.msra.mxu0 0.0
        %527 = vmatpush.msra.mxu0 0.0
        %528 = vmatpush.msra.mxu0 0.0
        %529 = vmatpush.msra.mxu0 0.0
        %530 = vmatpush.msra.mxu0 0.0
        %531 = vmatpush.msra.mxu0 0.0
        %532 = vmatpush.msra.mxu0 0.0
        %533 = vmatpush.msra.mxu0 0.0
        %534 = vmatpush.msra.mxu0 0.0
        %535 = vmatpush.msra.mxu0 %v518
        %536 = vmatmul.f32.gmra.mxu0 %v516
        %v537 = vpop.f32.mrf.mxu0
        %v538 = vadd.f32 0.0, %v537
        %539 = vdwg.mxu0
        %v540 = vadd.f32 %v512, %v538
        %541 = vrot.lane.b32.xlu0 %v430, 122
        %v542 = vpop.permute.xlu0 %541
        %v544 = vsel %vm297, %v241, 0
        %v546 = vsel %vm301, %v542, 0
        %548 = vmatpush.msra.mxu0 0.0
        %549 = vmatpush.msra.mxu0 0.0
        %550 = vmatpush.msra.mxu0 0.0
        %551 = vmatpush.msra.mxu0 0.0
        %552 = vmatpush.msra.mxu0 0.0
        %553 = vmatpush.msra.mxu0 0.0
        %554 = vmatpush.msra.mxu0 0.0
        %555 = vmatpush.msra.mxu0 0.0
        %556 = vmatpush.msra.mxu0 0.0
        %557 = vmatpush.msra.mxu0 0.0
        %558 = vmatpush.msra.mxu0 0.0
        %559 = vmatpush.msra.mxu0 0.0
        %560 = vmatpush.msra.mxu0 0.0
        %561 = vmatpush.msra.mxu0 0.0
        %562 = vmatpush.msra.mxu0 0.0
        %563 = vmatpush.msra.mxu0 %v546
        %564 = vmatmul.f32.gmra.mxu0 %v544
        %v565 = vpop.f32.mrf.mxu0
        %v566 = vadd.f32 0.0, %v565
        %567 = vdwg.mxu0
        %v568 = vadd.f32 %v540, %v566
        %570 = vset.pattern.permute.xlu0 0
        %571 = vperm.xlu0 %570, %v243
        %v572 = vpop.permute.xlu0 %571
        %v574 = vadd.f32 %v568, %v572
        %v575 = vsel %vm385, %v574, 0.0
        %576 = vadd.xlane.f32.xlu0 %v575
        %v577 = vpop.xlane.xlu0 %576
        %v578 = vmul.f32 %v577, %v395
        %v579 = vmul.f32 %v245, %v578
        %v580 = vsel %vm398, %v579, 0.0
        %v581 = vrot.slane %v580, 4
        %v582 = vadd.f32 %v580, %v581
        %v583 = vrot.slane %v582, 2
        %v584 = vadd.f32 %v582, %v583
        %v585 = vrot.slane %v584, 1
        %v586 = vadd.f32 %v584, %v585
        %v587 = vmax.f32 %v586, 0.0
        %v588 = vmul.f32 %v247, %v587
        %v589 = vadd.f32 %v588, 0.0
        %v590 = vxor.u32 %v589, 2147483648
        %v591 = vmul.f32 %v590, 1.442695
        %v592 = vpow.pop %v591
        %v593 = vadd.f32 %v592, 1.0
        %v594 = vrcp.pop %v593
        %v595 = vmul.f32 %v593, %v594
        %v596 = vsub.f32 1.0, %v595
        %v597 = vmul.f32 %v594, %v596
        %v598 = vadd.f32 %v594, %v597
        %vm599 = vweird.f32 %v593
        %vm600 = vweird.f32 %v594
        %vm601 = vmor %vm599, %vm600
        %v602 = vsel %vm601, %v594, %v598
        %v603 = vand.u32 2147483647, %v593
        %vm604 = vcmp.eq.f32.partialorder %v603, 8.507059e+37
        %v605 = vand.u32 %v593, 2147483648
        %v606 = vor.u32 1.1754944e-38, %v605
        %v607 = vsel %vm604, %v606, %v602
        %v608 = vmul.f32 1.0, %v607
        %v609 = vmul.f32 %v608, 1.442695
        %v610 = vpow.pop %v609
        %612 = vrot.lane.b32.xlu0 %v293, 126
        %v613 = vpop.permute.xlu0 %612
        %v615 = vsel %vm297, %v251, 0
        %v617 = vsel %vm301, %v613, 0
        %619 = vmatpush.msra.mxu0 0.0
        %620 = vmatpush.msra.mxu0 0.0
        %621 = vmatpush.msra.mxu0 0.0
        %622 = vmatpush.msra.mxu0 0.0
        %623 = vmatpush.msra.mxu0 0.0
        %624 = vmatpush.msra.mxu0 0.0
        %625 = vmatpush.msra.mxu0 0.0
        %626 = vmatpush.msra.mxu0 0.0
        %627 = vmatpush.msra.mxu0 0.0
        %628 = vmatpush.msra.mxu0 0.0
        %629 = vmatpush.msra.mxu0 0.0
        %630 = vmatpush.msra.mxu0 0.0
        %631 = vmatpush.msra.mxu0 0.0
        %632 = vmatpush.msra.mxu0 0.0
        %633 = vmatpush.msra.mxu0 0.0
        %634 = vmatpush.msra.mxu0 %v617
        %635 = vmatmul.f32.gmra.mxu0 %v615
        %v636 = vpop.f32.mrf.mxu0
        %v637 = vadd.f32 0.0, %v636
        %638 = vdwg.mxu0
        %639 = vrot.lane.b32.xlu0 %v293, 127
        %v640 = vpop.permute.xlu0 %639
        %v642 = vsel %vm297, %v249, 0
        %v644 = vsel %vm301, %v640, 0
        %646 = vmatpush.msra.mxu0 0.0
        %647 = vmatpush.msra.mxu0 0.0
        %648 = vmatpush.msra.mxu0 0.0
        %649 = vmatpush.msra.mxu0 0.0
        %650 = vmatpush.msra.mxu0 0.0
        %651 = vmatpush.msra.mxu0 0.0
        %652 = vmatpush.msra.mxu0 0.0
        %653 = vmatpush.msra.mxu0 0.0
        %654 = vmatpush.msra.mxu0 0.0
        %655 = vmatpush.msra.mxu0 0.0
        %656 = vmatpush.msra.mxu0 0.0
        %657 = vmatpush.msra.mxu0 0.0
        %658 = vmatpush.msra.mxu0 0.0
        %659 = vmatpush.msra.mxu0 0.0
        %660 = vmatpush.msra.mxu0 0.0
        %661 = vmatpush.msra.mxu0 %v644
        %662 = vmatmul.f32.gmra.mxu0 %v642
        %v663 = vpop.f32.mrf.mxu0
        %v664 = vadd.f32 %v637, %v663
        %665 = vdwg.mxu0
        %666 = vrot.lane.b32.xlu0 %v293, 125
        %v667 = vpop.permute.xlu0 %666
        %v669 = vsel %vm297, %v253, 0
        %v671 = vsel %vm301, %v667, 0
        %673 = vmatpush.msra.mxu0 0.0
        %674 = vmatpush.msra.mxu0 0.0
        %675 = vmatpush.msra.mxu0 0.0
        %676 = vmatpush.msra.mxu0 0.0
        %677 = vmatpush.msra.mxu0 0.0
        %678 = vmatpush.msra.mxu0 0.0
        %679 = vmatpush.msra.mxu0 0.0
        %680 = vmatpush.msra.mxu0 0.0
        %681 = vmatpush.msra.mxu0 0.0
        %682 = vmatpush.msra.mxu0 0.0
        %683 = vmatpush.msra.mxu0 0.0
        %684 = vmatpush.msra.mxu0 0.0
        %685 = vmatpush.msra.mxu0 0.0
        %686 = vmatpush.msra.mxu0 0.0
        %687 = vmatpush.msra.mxu0 0.0
        %688 = vmatpush.msra.mxu0 %v671
        %689 = vmatmul.f32.gmra.mxu0 %v669
        %v690 = vpop.f32.mrf.mxu0
        %v691 = vadd.f32 0.0, %v690
        %692 = vdwg.mxu0
        %v693 = vadd.f32 %v664, %v691
        %694 = vrot.lane.b32.xlu0 %v293, 124
        %v695 = vpop.permute.xlu0 %694
        %v697 = vsel %vm297, %v255, 0
        %v699 = vsel %vm301, %v695, 0
        %701 = vmatpush.msra.mxu0 0.0
        %702 = vmatpush.msra.mxu0 0.0
        %703 = vmatpush.msra.mxu0 0.0
        %704 = vmatpush.msra.mxu0 0.0
        %705 = vmatpush.msra.mxu0 0.0
        %706 = vmatpush.msra.mxu0 0.0
        %707 = vmatpush.msra.mxu0 0.0
        %708 = vmatpush.msra.mxu0 0.0
        %709 = vmatpush.msra.mxu0 0.0
        %710 = vmatpush.msra.mxu0 0.0
        %711 = vmatpush.msra.mxu0 0.0
        %712 = vmatpush.msra.mxu0 0.0
        %713 = vmatpush.msra.mxu0 0.0
        %714 = vmatpush.msra.mxu0 0.0
        %715 = vmatpush.msra.mxu0 0.0
        %716 = vmatpush.msra.mxu0 %v699
        %717 = vmatmul.f32.gmra.mxu0 %v697
        %v718 = vpop.f32.mrf.mxu0
        %v719 = vadd.f32 0.0, %v718
        %720 = vdwg.mxu0
        %v721 = vadd.f32 %v693, %v719
        %722 = vrot.lane.b32.xlu0 %v293, 123
        %v723 = vpop.permute.xlu0 %722
        %v725 = vsel %vm297, %v257, 0
        %v727 = vsel %vm301, %v723, 0
        %729 = vmatpush.msra.mxu0 0.0
        %730 = vmatpush.msra.mxu0 0.0
        %731 = vmatpush.msra.mxu0 0.0
        %732 = vmatpush.msra.mxu0 0.0
        %733 = vmatpush.msra.mxu0 0.0
        %734 = vmatpush.msra.mxu0 0.0
        %735 = vmatpush.msra.mxu0 0.0
        %736 = vmatpush.msra.mxu0 0.0
        %737 = vmatpush.msra.mxu0 0.0
        %738 = vmatpush.msra.mxu0 0.0
        %739 = vmatpush.msra.mxu0 0.0
        %740 = vmatpush.msra.mxu0 0.0
        %741 = vmatpush.msra.mxu0 0.0
        %742 = vmatpush.msra.mxu0 0.0
        %743 = vmatpush.msra.mxu0 0.0
        %744 = vmatpush.msra.mxu0 %v727
        %745 = vmatmul.f32.gmra.mxu0 %v725
        %v746 = vpop.f32.mrf.mxu0
        %v747 = vadd.f32 0.0, %v746
        %748 = vdwg.mxu0
        %v749 = vadd.f32 %v721, %v747
        %750 = vrot.lane.b32.xlu0 %v293, 122
        %v751 = vpop.permute.xlu0 %750
        %v753 = vsel %vm297, %v259, 0
        %v755 = vsel %vm301, %v751, 0
        %757 = vmatpush.msra.mxu0 0.0
        %758 = vmatpush.msra.mxu0 0.0
        %759 = vmatpush.msra.mxu0 0.0
        %760 = vmatpush.msra.mxu0 0.0
        %761 = vmatpush.msra.mxu0 0.0
        %762 = vmatpush.msra.mxu0 0.0
        %763 = vmatpush.msra.mxu0 0.0
        %764 = vmatpush.msra.mxu0 0.0
        %765 = vmatpush.msra.mxu0 0.0
        %766 = vmatpush.msra.mxu0 0.0
        %767 = vmatpush.msra.mxu0 0.0
        %768 = vmatpush.msra.mxu0 0.0
        %769 = vmatpush.msra.mxu0 0.0
        %770 = vmatpush.msra.mxu0 0.0
        %771 = vmatpush.msra.mxu0 0.0
        %772 = vmatpush.msra.mxu0 %v755
        %773 = vmatmul.f32.gmra.mxu0 %v753
        %v774 = vpop.f32.mrf.mxu0
        %v775 = vadd.f32 0.0, %v774
        %776 = vdwg.mxu0
        %v777 = vadd.f32 %v749, %v775
        %778 = vrot.lane.b32.xlu0 %v293, 121
        %v779 = vpop.permute.xlu0 %778
        %v781 = vsel %vm297, %v261, 0
        %v783 = vsel %vm301, %v779, 0
        %785 = vmatpush.msra.mxu0 0.0
        %786 = vmatpush.msra.mxu0 0.0
        %787 = vmatpush.msra.mxu0 0.0
        %788 = vmatpush.msra.mxu0 0.0
        %789 = vmatpush.msra.mxu0 0.0
        %790 = vmatpush.msra.mxu0 0.0
        %791 = vmatpush.msra.mxu0 0.0
        %792 = vmatpush.msra.mxu0 0.0
        %793 = vmatpush.msra.mxu0 0.0
        %794 = vmatpush.msra.mxu0 0.0
        %795 = vmatpush.msra.mxu0 0.0
        %796 = vmatpush.msra.mxu0 0.0
        %797 = vmatpush.msra.mxu0 0.0
        %798 = vmatpush.msra.mxu0 0.0
        %799 = vmatpush.msra.mxu0 0.0
        %800 = vmatpush.msra.mxu0 %v783
        %801 = vmatmul.f32.gmra.mxu0 %v781
        %v802 = vpop.f32.mrf.mxu0
        %v803 = vadd.f32 0.0, %v802
        %804 = vdwg.mxu0
        %v805 = vadd.f32 %v777, %v803
        %807 = vset.pattern.permute.xlu0 0
        %808 = vperm.xlu0 %807, %v263
        %v809 = vpop.permute.xlu0 %808
        %v811 = vadd.f32 %v805, %v809
        %v812 = vsel %vm385, %v811, 0.0
        %813 = vadd.xlane.f32.xlu0 %v812
        %v814 = vpop.xlane.xlu0 %813
        %v815 = vmul.f32 %v814, %v395
        %v816 = vmul.f32 %v265, %v815
        %v817 = vsel %vm398, %v816, 0.0
        %v818 = vrot.slane %v817, 4
        %v819 = vadd.f32 %v817, %v818
        %v820 = vrot.slane %v819, 2
        %v821 = vadd.f32 %v819, %v820
        %v822 = vrot.slane %v821, 1
        %v823 = vadd.f32 %v821, %v822
        %v824 = vmax.f32 %v823, 0.0
        %v825 = vmul.f32 %v267, %v824
        %v826 = vadd.f32 %v825, 0.0
        %v827 = vxor.u32 %v826, 2147483648
        %v828 = vmul.f32 %v827, 1.442695
        %v829 = vpow.pop %v828
        %v830 = vadd.f32 %v829, 1.0
        %v831 = vrcp.pop %v830
        %v832 = vmul.f32 %v830, %v831
        %v833 = vsub.f32 1.0, %v832
        %v834 = vmul.f32 %v831, %v833
        %v835 = vadd.f32 %v831, %v834
        %vm836 = vweird.f32 %v830
        %vm837 = vweird.f32 %v831
        %vm838 = vmor %vm836, %vm837
        %v839 = vsel %vm838, %v831, %v835
        %v840 = vand.u32 2147483647, %v830
        %vm841 = vcmp.eq.f32.partialorder %v840, 8.507059e+37
        %v842 = vand.u32 %v830, 2147483648
        %v843 = vor.u32 1.1754944e-38, %v842
        %v844 = vsel %vm841, %v843, %v839
        %v845 = vmul.f32 1.0, %v844
        %v846 = vmul.f32 %v845, 1.442695
        %v847 = vpow.pop %v846
        %v848 = vrot.slane %v293, 4
        %849 = vrot.lane.b32.xlu0 %v848, 127
        %v850 = vpop.permute.xlu0 %849
        %v852 = vsel %vm297, %v271, 0
        %v854 = vsel %vm301, %v850, 0
        %856 = vmatpush.msra.mxu0 0.0
        %857 = vmatpush.msra.mxu0 0.0
        %858 = vmatpush.msra.mxu0 0.0
        %859 = vmatpush.msra.mxu0 0.0
        %860 = vmatpush.msra.mxu0 0.0
        %861 = vmatpush.msra.mxu0 0.0
        %862 = vmatpush.msra.mxu0 0.0
        %863 = vmatpush.msra.mxu0 0.0
        %864 = vmatpush.msra.mxu0 0.0
        %865 = vmatpush.msra.mxu0 0.0
        %866 = vmatpush.msra.mxu0 0.0
        %867 = vmatpush.msra.mxu0 0.0
        %868 = vmatpush.msra.mxu0 0.0
        %869 = vmatpush.msra.mxu0 0.0
        %870 = vmatpush.msra.mxu0 0.0
        %871 = vmatpush.msra.mxu0 %v854
        %872 = vmatmul.f32.gmra.mxu0 %v852
        %v873 = vpop.f32.mrf.mxu0
        %v874 = vadd.f32 0.0, %v873
        %875 = vdwg.mxu0
        %v877 = vsel %vm297, %v269, 0
        %v879 = vsel %vm301, %v848, 0
        %881 = vmatpush.msra.mxu0 0.0
        %882 = vmatpush.msra.mxu0 0.0
        %883 = vmatpush.msra.mxu0 0.0
        %884 = vmatpush.msra.mxu0 0.0
        %885 = vmatpush.msra.mxu0 0.0
        %886 = vmatpush.msra.mxu0 0.0
        %887 = vmatpush.msra.mxu0 0.0
        %888 = vmatpush.msra.mxu0 0.0
        %889 = vmatpush.msra.mxu0 0.0
        %890 = vmatpush.msra.mxu0 0.0
        %891 = vmatpush.msra.mxu0 0.0
        %892 = vmatpush.msra.mxu0 0.0
        %893 = vmatpush.msra.mxu0 0.0
        %894 = vmatpush.msra.mxu0 0.0
        %895 = vmatpush.msra.mxu0 0.0
        %896 = vmatpush.msra.mxu0 %v879
        %897 = vmatmul.f32.gmra.mxu0 %v877
        %v898 = vpop.f32.mrf.mxu0
        %v899 = vadd.f32 %v874, %v898
        %900 = vdwg.mxu0
        %901 = vrot.lane.b32.xlu0 %v848, 126
        %v902 = vpop.permute.xlu0 %901
        %v904 = vsel %vm297, %v273, 0
        %v906 = vsel %vm301, %v902, 0
        %908 = vmatpush.msra.mxu0 0.0
        %909 = vmatpush.msra.mxu0 0.0
        %910 = vmatpush.msra.mxu0 0.0
        %911 = vmatpush.msra.mxu0 0.0
        %912 = vmatpush.msra.mxu0 0.0
        %913 = vmatpush.msra.mxu0 0.0
        %914 = vmatpush.msra.mxu0 0.0
        %915 = vmatpush.msra.mxu0 0.0
        %916 = vmatpush.msra.mxu0 0.0
        %917 = vmatpush.msra.mxu0 0.0
        %918 = vmatpush.msra.mxu0 0.0
        %919 = vmatpush.msra.mxu0 0.0
        %920 = vmatpush.msra.mxu0 0.0
        %921 = vmatpush.msra.mxu0 0.0
        %922 = vmatpush.msra.mxu0 0.0
        %923 = vmatpush.msra.mxu0 %v906
        %924 = vmatmul.f32.gmra.mxu0 %v904
        %v925 = vpop.f32.mrf.mxu0
        %v926 = vadd.f32 0.0, %v925
        %927 = vdwg.mxu0
        %v928 = vadd.f32 %v899, %v926
        %929 = vrot.lane.b32.xlu0 %v848, 125
        %v930 = vpop.permute.xlu0 %929
        %v932 = vsel %vm297, %v275, 0
        %v934 = vsel %vm301, %v930, 0
        %936 = vmatpush.msra.mxu0 0.0
        %937 = vmatpush.msra.mxu0 0.0
        %938 = vmatpush.msra.mxu0 0.0
        %939 = vmatpush.msra.mxu0 0.0
        %940 = vmatpush.msra.mxu0 0.0
        %941 = vmatpush.msra.mxu0 0.0
        %942 = vmatpush.msra.mxu0 0.0
        %943 = vmatpush.msra.mxu0 0.0
        %944 = vmatpush.msra.mxu0 0.0
        %945 = vmatpush.msra.mxu0 0.0
        %946 = vmatpush.msra.mxu0 0.0
        %947 = vmatpush.msra.mxu0 0.0
        %948 = vmatpush.msra.mxu0 0.0
        %949 = vmatpush.msra.mxu0 0.0
        %950 = vmatpush.msra.mxu0 0.0
        %951 = vmatpush.msra.mxu0 %v934
        %952 = vmatmul.f32.gmra.mxu0 %v932
        %v953 = vpop.f32.mrf.mxu0
        %v954 = vadd.f32 0.0, %v953
        %955 = vdwg.mxu0
        %v956 = vadd.f32 %v928, %v954
        %957 = vrot.lane.b32.xlu0 %v848, 124
        %v958 = vpop.permute.xlu0 %957
        %v960 = vsel %vm297, %v277, 0
        %v962 = vsel %vm301, %v958, 0
        %964 = vmatpush.msra.mxu0 0.0
        %965 = vmatpush.msra.mxu0 0.0
        %966 = vmatpush.msra.mxu0 0.0
        %967 = vmatpush.msra.mxu0 0.0
        %968 = vmatpush.msra.mxu0 0.0
        %969 = vmatpush.msra.mxu0 0.0
        %970 = vmatpush.msra.mxu0 0.0
        %971 = vmatpush.msra.mxu0 0.0
        %972 = vmatpush.msra.mxu0 0.0
        %973 = vmatpush.msra.mxu0 0.0
        %974 = vmatpush.msra.mxu0 0.0
        %975 = vmatpush.msra.mxu0 0.0
        %976 = vmatpush.msra.mxu0 0.0
        %977 = vmatpush.msra.mxu0 0.0
        %978 = vmatpush.msra.mxu0 0.0
        %979 = vmatpush.msra.mxu0 %v962
        %980 = vmatmul.f32.gmra.mxu0 %v960
        %v981 = vpop.f32.mrf.mxu0
        %v982 = vadd.f32 0.0, %v981
        %983 = vdwg.mxu0
        %v984 = vadd.f32 %v956, %v982
        %985 = vrot.lane.b32.xlu0 %v848, 123
        %v986 = vpop.permute.xlu0 %985
        %v988 = vsel %vm297, %v279, 0
        %v990 = vsel %vm301, %v986, 0
        %992 = vmatpush.msra.mxu0 0.0
        %993 = vmatpush.msra.mxu0 0.0
        %994 = vmatpush.msra.mxu0 0.0
        %995 = vmatpush.msra.mxu0 0.0
        %996 = vmatpush.msra.mxu0 0.0
        %997 = vmatpush.msra.mxu0 0.0
        %998 = vmatpush.msra.mxu0 0.0
        %999 = vmatpush.msra.mxu0 0.0
        %1000 = vmatpush.msra.mxu0 0.0
        %1001 = vmatpush.msra.mxu0 0.0
        %1002 = vmatpush.msra.mxu0 0.0
        %1003 = vmatpush.msra.mxu0 0.0
        %1004 = vmatpush.msra.mxu0 0.0
        %1005 = vmatpush.msra.mxu0 0.0
        %1006 = vmatpush.msra.mxu0 0.0
        %1007 = vmatpush.msra.mxu0 %v990
        %1008 = vmatmul.f32.gmra.mxu0 %v988
        %v1009 = vpop.f32.mrf.mxu0
        %v1010 = vadd.f32 0.0, %v1009
        %1011 = vdwg.mxu0
        %v1012 = vadd.f32 %v984, %v1010
        %1013 = vrot.lane.b32.xlu0 %v848, 122
        %v1014 = vpop.permute.xlu0 %1013
        %v1016 = vsel %vm297, %v281, 0
        %v1018 = vsel %vm301, %v1014, 0
        %1020 = vmatpush.msra.mxu0 0.0
        %1021 = vmatpush.msra.mxu0 0.0
        %1022 = vmatpush.msra.mxu0 0.0
        %1023 = vmatpush.msra.mxu0 0.0
        %1024 = vmatpush.msra.mxu0 0.0
        %1025 = vmatpush.msra.mxu0 0.0
        %1026 = vmatpush.msra.mxu0 0.0
        %1027 = vmatpush.msra.mxu0 0.0
        %1028 = vmatpush.msra.mxu0 0.0
        %1029 = vmatpush.msra.mxu0 0.0
        %1030 = vmatpush.msra.mxu0 0.0
        %1031 = vmatpush.msra.mxu0 0.0
        %1032 = vmatpush.msra.mxu0 0.0
        %1033 = vmatpush.msra.mxu0 0.0
        %1034 = vmatpush.msra.mxu0 0.0
        %1035 = vmatpush.msra.mxu0 %v1018
        %1036 = vmatmul.f32.gmra.mxu0 %v1016
        %v1037 = vpop.f32.mrf.mxu0
        %v1038 = vadd.f32 0.0, %v1037
        %1039 = vdwg.mxu0
        %v1040 = vadd.f32 %v1012, %v1038
        %1041 = vrot.lane.b32.xlu0 %v848, 121
        %v1042 = vpop.permute.xlu0 %1041
        %v1044 = vsel %vm297, %v283, 0
        %v1046 = vsel %vm301, %v1042, 0
        %1048 = vmatpush.msra.mxu0 0.0
        %1049 = vmatpush.msra.mxu0 0.0
        %1050 = vmatpush.msra.mxu0 0.0
        %1051 = vmatpush.msra.mxu0 0.0
        %1052 = vmatpush.msra.mxu0 0.0
        %1053 = vmatpush.msra.mxu0 0.0
        %1054 = vmatpush.msra.mxu0 0.0
        %1055 = vmatpush.msra.mxu0 0.0
        %1056 = vmatpush.msra.mxu0 0.0
        %1057 = vmatpush.msra.mxu0 0.0
        %1058 = vmatpush.msra.mxu0 0.0
        %1059 = vmatpush.msra.mxu0 0.0
        %1060 = vmatpush.msra.mxu0 0.0
        %1061 = vmatpush.msra.mxu0 0.0
        %1062 = vmatpush.msra.mxu0 0.0
        %1063 = vmatpush.msra.mxu0 %v1046
        %1064 = vmatmul.f32.gmra.mxu0 %v1044
        %v1065 = vpop.f32.mrf.mxu0
        %v1066 = vadd.f32 0.0, %v1065
        %1067 = vdwg.mxu0
        %v1068 = vadd.f32 %v1040, %v1066
        %1069 = vrot.lane.b32.xlu0 %v848, 120
        %v1070 = vpop.permute.xlu0 %1069
        %v1072 = vsel %vm297, %v285, 0
        %v1074 = vsel %vm301, %v1070, 0
        %1076 = vmatpush.msra.mxu0 0.0
        %1077 = vmatpush.msra.mxu0 0.0
        %1078 = vmatpush.msra.mxu0 0.0
        %1079 = vmatpush.msra.mxu0 0.0
        %1080 = vmatpush.msra.mxu0 0.0
        %1081 = vmatpush.msra.mxu0 0.0
        %1082 = vmatpush.msra.mxu0 0.0
        %1083 = vmatpush.msra.mxu0 0.0
        %1084 = vmatpush.msra.mxu0 0.0
        %1085 = vmatpush.msra.mxu0 0.0
        %1086 = vmatpush.msra.mxu0 0.0
        %1087 = vmatpush.msra.mxu0 0.0
        %1088 = vmatpush.msra.mxu0 0.0
        %1089 = vmatpush.msra.mxu0 0.0
        %1090 = vmatpush.msra.mxu0 0.0
        %1091 = vmatpush.msra.mxu0 %v1074
        %1092 = vmatmul.f32.gmra.mxu0 %v1072
        %v1093 = vpop.f32.mrf.mxu0
        %v1094 = vadd.f32 0.0, %v1093
        %1095 = vdwg.mxu0
        %v1096 = vadd.f32 %v1068, %v1094
        %1098 = vset.pattern.permute.xlu0 0
        %1099 = vperm.xlu0 %1098, %v287
        %v1100 = vpop.permute.xlu0 %1099
        %v1102 = vadd.f32 %v1096, %v1100
        %v1103 = vsel %vm385, %v1102, 0.0
        %1104 = vadd.xlane.f32.xlu0 %v1103
        %v1105 = vpop.xlane.xlu0 %1104
        %v1106 = vmul.f32 %v1105, %v395
        %v1107 = vmul.f32 %v289, %v1106
        %v1108 = vsel %vm398, %v1107, 0.0
        %v1109 = vrot.slane %v1108, 4
        %v1110 = vadd.f32 %v1108, %v1109
        %v1111 = vrot.slane %v1110, 2
        %v1112 = vadd.f32 %v1110, %v1111
        %v1113 = vrot.slane %v1112, 1
        %v1114 = vadd.f32 %v1112, %v1113
        %v1115 = vmax.f32 %v1114, 0.0
        %v1116 = vmul.f32 %v291, %v1115
        %v1117 = vadd.f32 %v1116, 0.0
        %v1118 = vxor.u32 %v1117, 2147483648
        %v1119 = vmul.f32 %v1118, 1.442695
        %v1120 = vpow.pop %v1119
        %v1121 = vadd.f32 %v1120, 1.0
        %v1122 = vrcp.pop %v1121
        %v1123 = vmul.f32 %v1121, %v1122
        %v1124 = vsub.f32 1.0, %v1123
        %v1125 = vmul.f32 %v1122, %v1124
        %v1126 = vadd.f32 %v1122, %v1125
        %vm1127 = vweird.f32 %v1121
        %vm1128 = vweird.f32 %v1122
        %vm1129 = vmor %vm1127, %vm1128
        %v1130 = vsel %vm1129, %v1122, %v1126
        %v1131 = vand.u32 2147483647, %v1121
        %vm1132 = vcmp.eq.f32.partialorder %v1131, 8.507059e+37
        %v1133 = vand.u32 %v1121, 2147483648
        %v1134 = vor.u32 1.1754944e-38, %v1133
        %v1135 = vsel %vm1132, %v1134, %v1130
        %v1136 = vmul.f32 1.0, %v1135
        %v1137 = vmul.f32 %v1136, 1.442695
        %v1138 = vpow.pop %v1137
        %v1139 = vadd.f32 %v429, %v610
        %v1140 = vadd.f32 %v1139, %v847
        %v1141 = vadd.f32 %v1140, %v1138
        %v1142 = vrcp.pop %v1141
        %v1143 = vmul.f32 %v1141, %v1142
        %v1144 = vsub.f32 1.0, %v1143
        %v1145 = vmul.f32 %v1142, %v1144
        %v1146 = vadd.f32 %v1142, %v1145
        %vm1147 = vweird.f32 %v1141
        %vm1148 = vweird.f32 %v1142
        %vm1149 = vmor %vm1147, %vm1148
        %v1150 = vsel %vm1149, %v1142, %v1146
        %v1151 = vand.u32 2147483647, %v1141
        %vm1152 = vcmp.eq.f32.partialorder %v1151, 8.507059e+37
        %v1153 = vand.u32 %v1141, 2147483648
        %v1154 = vor.u32 1.1754944e-38, %v1153
        %v1155 = vsel %vm1152, %v1154, %v1150
        %v1156 = vmul.f32 1.0, %v1155
        %v1157 = vmul.f32 %v429, %v1156
        %1159 = vset.pattern.permute.xlu0 0
        %1160 = vperm.xlu0 %1159, %v1157
        %v1161 = vpop.permute.xlu0 %1160
        %v1163 = vmul.f32 %v384, %v1161
        %v1164 = vmul.f32 %v610, %v1156
        %1166 = vset.pattern.permute.xlu0 0
        %1167 = vperm.xlu0 %1166, %v1164
        %v1168 = vpop.permute.xlu0 %1167
        %v1170 = vmul.f32 %v574, %v1168
        %v1171 = vmul.f32 %v847, %v1156
        %1173 = vset.pattern.permute.xlu0 0
        %1174 = vperm.xlu0 %1173, %v1171
        %v1175 = vpop.permute.xlu0 %1174
        %v1177 = vmul.f32 %v811, %v1175
        %v1178 = vmul.f32 %v1138, %v1156
        %1180 = vset.pattern.permute.xlu0 0
        %1181 = vperm.xlu0 %1180, %v1178
        %v1182 = vpop.permute.xlu0 %1181
        %v1184 = vmul.f32 %v1102, %v1182
        %v1186 = vrot.slane %v1170, 4
        %v1189 = vrot.slane %v1184, 4
        %v1191 = vsel %vm301, %v1163, %v1186
        %v1192 = vsel %vm301, %v1177, %v1189
        %vm1193 = vcmask 130048
        %1194 = vst.msk [vmem:[%s217] sm:$0xff] %vm1193, %v1191
        %1195 = vst.msk [vmem:[%s217 + $0x8] sm:$0xff] %vm1193, %v1192
        %s1196 = sand.u32 %s137, 1
        %s1197 = scalar_lea.sflag [#allocation3], %s1196
        %s1198 = sand.u32 %s137, 1
        %s1199 = smul.addr %s1198, 16
        %s1200 = scalar_lea.vmem [#allocation2], %s1199
        // Predicated region
        $region41: #{tpu_custom_call.1} parent=39 // pred_check
          %p1201 = pneg %p147
        $region42: #{tpu_custom_call.1} parent=39 // pred_check_branch
          %1203 = sbr.rel (%p1201) target = $region44
        $region43: #{tpu_custom_call.1} parent=39 // pred_region
          %1205 = vsyncadd %s1197, 0
          %s1206 = smul.addr %s19, 2
          %s1207 = smul.addr %s1206, 8
          %s1208 = scalar_lea.hbm %s5, %s1207
          %s1209 = sshll.u32 %s1200, 4
          %s1210 = int_to_ptr.vmem [resolvable:$true] %s1209
          %s1211 = sshll.u32 %s1208, 4
          %s1212 = int_to_ptr.hbm [resolvable:$true] %s1211
          %1217 = dma.vmem_to_hbm [thread:$0]  %s1210, 256, %s1212, %s1197, 128, 128, 8
        $region44: #{tpu_custom_call.1} parent=39 // pred_fallthru
          _
      $region40: #{tpu_custom_call.1} parent=5 // pred_fallthru
        _
      %p1218 = scmp.le.s32.totalorder 2, %s14
      // Predicated region
      $region45: #{tpu_custom_call.1} parent=5 // pred_check
        %p1219 = pneg %p1218
      $region46: #{tpu_custom_call.1} parent=5 // pred_check_branch
        %1221 = sbr.rel (%p1219) target = $region48
      $region47: #{tpu_custom_call.1} parent=5 // pred_region
        %s1222 = ssub.s32 %s14, 2
        // Predicated region
        $region49: #{tpu_custom_call.1} parent=47 // pred_check
          %p1223 = pneg %p153
        $region50: #{tpu_custom_call.1} parent=47 // pred_check_branch
          %1225 = sbr.rel (%p1223) target = $region52
        $region51: #{tpu_custom_call.1} parent=47 // pred_region
          %s1226 = sand.u32 %s138, 1
          %s1227 = scalar_lea.sflag [#allocation3], %s1226
          %s1228 = sand.u32 %s138, 1
          %s1229 = smul.addr %s1228, 16
          %s1230 = scalar_lea.vmem [#allocation2], %s1229
          %1232 = dma.done %s1227, 256
        $region52: #{tpu_custom_call.1} parent=47 // pred_fallthru
          _
      $region48: #{tpu_custom_call.1} parent=5 // pred_fallthru
        _
    $region6: #{tpu_custom_call.1} parent=1 // loop_footer
      %s18 = sadd.s32 1, %s14
    $region7: #{tpu_custom_call.1} parent=1 // loop_footer_branch
      %13 = sbr.rel target = $region3
    $region8: #{tpu_custom_call.1} parent=1 // loop_exit
      _
    %1233 = vsyncpa [#allocation3], 1
    %s1234 = scalar_lea.sflag [#allocation3], 1
    %1235 = vsyncpa %s1234, 1

</llo_original>
